<compile_context>
chip_gen: v7x
topology: tpu7x:2x2x1
jax: 0.10.0
libtpu: 0.0.40
codegen_flags: <defaults>
</compile_context>

<pallas_src>
import functools

import numpy as np
import jax
import jax.numpy as jnp
from jax.experimental import pallas as pl
from jax.experimental.pallas import tpu as pltpu

# --------------------------------------------------------------------------
# Small, deterministic "config"
# --------------------------------------------------------------------------
VOCAB = 64
EMBED = 16          # setting.embed_size
HIDDEN = 32         # setting.hidden_size  -> fused gates = 8H = 256 lanes
MLP_DIM = 32        # setting.dim (single hidden layer in the generation MLP)
BATCH = 2
SEQ = 8
PAD_ID, BOS_ID, EOS_ID = 0, 1, 2

_HIGHEST = jax.lax.Precision.HIGHEST


def _dot_hi(a, b):
    """f32-exact matmul (off the serial path: input projection, MLP head)."""
    return jnp.dot(a, b, preferred_element_type=jnp.float32, precision=_HIGHEST)


def _dot_rec(h_f32, w_bf16):
    """Recurrent matmul: single bf16 MXU pass, f32 accumulate (perf review)."""
    return jnp.dot(h_f32.astype(jnp.bfloat16), w_bf16,
                   preferred_element_type=jnp.float32)


# --------------------------------------------------------------------------
# The fused Pallas kernel: direction-fused bi-LSTM recurrence + generation head
# --------------------------------------------------------------------------
def extract_kernel(gx_ref, act_ref, whh_ref, fill_ref,
                   w1_ref, b1_ref, w2_ref, b2_ref,
                   outs_ref, head_ref, *, batch, seq, hidden):
    B, S, H = batch, seq, hidden
    f32 = jnp.float32

    gx_all = gx_ref[...]                 # (S*B, 8H) time-major, gate-interleaved
    whh = whh_ref[...]                   # (2H, 8H)  bf16 block-diagonal W_hh
    act = act_ref[...] > 0.5             # (S*B, 2H) bool — compare hoisted

    # ---- fused forward+backward recurrence, statically unrolled over S -----
    h = jnp.zeros((B, 2 * H), f32)       # lanes [0:H)=forward h, [H:2H)=backward h
    c = jnp.zeros((B, 2 * H), f32)
    for t in range(S):
        # forward gx at time t and backward gx at time S-1-t share this row block
        gates = gx_all[t * B:(t + 1) * B, :] + _dot_rec(h, whh)      # (B, 8H)
        i_g = jax.nn.sigmoid(gates[:, 0 * 2 * H:1 * 2 * H])
        f_g = jax.nn.sigmoid(gates[:, 1 * 2 * H:2 * 2 * H])
        g_g = jnp.tanh(gates[:, 2 * 2 * H:3 * 2 * H])
        o_g = jax.nn.sigmoid(gates[:, 3 * 2 * H:4 * 2 * H])
        c_new = f_g * c + i_g * g_g
        h_new = o_g * jnp.tanh(c_new)
        a_t = act[t * B:(t + 1) * B, :]                              # (B, 2H)
        c = jnp.where(a_t, c_new, c)       # packed-sequence: freeze past length
        h = jnp.where(a_t, h_new, h)
        h_out = jnp.where(a_t, h_new, 0.0)
        # store straight into the time-major output: forward half belongs to
        # time t, backward half to time S-1-t (no list / concat relayout)
        outs_ref[t * B:(t + 1) * B, 0:H] = h_out[:, 0:H]
        outs_ref[(S - 1 - t) * B:(S - t) * B, H:2 * H] = h_out[:, H:2 * H]

    # ---- generation head directly on the time-major (S*B, 2H) block -------
    flat = outs_ref[...]                                             # (S*B, 2H)
    h1 = jnp.maximum(_dot_hi(flat, w1_ref[...]) + b1_ref[...], 0.0)  # (S*B, D1)
    logits = _dot_hi(h1, w2_ref[...]) + b2_ref[...]                  # (S*B, 2)
    l0 = logits[:, 0:1]
    l1 = logits[:, 1:2]
    m = jnp.maximum(l0, l1)
    e0 = jnp.exp(l0 - m)
    e1 = jnp.exp(l1 - m)
    denom = e0 + e1
    p0 = e0 / denom
    p1 = e1 / denom

    fill = fill_ref[...] > 0.5                                       # (S*B, 1)
    p0 = jnp.where(fill, 1.0, p0)
    p1 = jnp.where(fill, 1.0, p1)
    pred_prob = jnp.maximum(p0, p1)
    pred_action = (p1 > p0).astype(f32)       # ties -> 0 (torch first-max)
    logp = jnp.log(pred_prob + 1e-20)

    # one packed output row per (t, b): [prob, action, logp]
    head_ref[...] = jnp.concatenate([pred_prob, pred_action, logp], axis=1)


# --------------------------------------------------------------------------
# Wrapper: fold embedding into gx, build fused weights/masks, call the kernel
# --------------------------------------------------------------------------
@jax.jit
def extract_forward(code_ids, code_lens, params):
    emb, wf_ih, wf_hh, bf, wb_ih, wb_hh, bb, w1, b1, w2, b2 = params
    B, S = code_ids.shape
    V, E = emb.shape
    H = wf_hh.shape[0]
    D1 = w1.shape[1]
    f32 = jnp.float32

    # Embedding folded out of the kernel: exact gather + one input-projection
    # matmul per direction (HIGHEST; not on the serial recurrent path).
    x = emb[code_ids].reshape(B * S, E)                        # (B*S, E)
    gxf = (_dot_hi(x, wf_ih) + bf).reshape(B, S, 4, H)
    gxb = (_dot_hi(x, wb_ih) + bb).reshape(B, S, 4, H)
    gxb = gxb[:, ::-1]                                         # backward scan order
    # gate-interleaved [i_f,i_b,f_f,f_b,g_f,g_b,o_f,o_b]; time-major (t, b) rows
    gx = jnp.concatenate([gxf, gxb], axis=-1)                  # (B, S, 4, 2H)
    gx = gx.reshape(B, S, 8 * H).transpose(1, 0, 2).reshape(S * B, 8 * H)

    # Block-diagonal fused recurrent weights: (2H, 8H), bf16 (one MXU pass/step)
    whh = jnp.zeros((2 * H, 4, 2 * H), f32)
    whh = whh.at[:H, :, :H].set(wf_hh.reshape(H, 4, H))
    whh = whh.at[H:, :, H:].set(wb_hh.reshape(H, 4, H))
    whh = whh.reshape(2 * H, 8 * H).astype(jnp.bfloat16)

    # Hoisted per-step activity masks (fwd lanes | bwd lanes) and head fill
    # mask, all in time-major (t, b) row order.
    t_idx = jnp.arange(S)[:, None]                             # (S, 1)
    act_f = (t_idx < code_lens[None, :]).astype(f32)           # (S, B)
    act_b = ((S - 1 - t_idx) < code_lens[None, :]).astype(f32)
    act = jnp.concatenate(
        [jnp.broadcast_to(act_f[:, :, None], (S, B, H)),
         jnp.broadcast_to(act_b[:, :, None], (S, B, H))],
        axis=-1).reshape(S * B, 2 * H)
    fill = ((t_idx == 0) | (t_idx >= code_lens[None, :] - 1)
            ).astype(f32).reshape(S * B, 1)

    def full_spec(shape):
        return pl.BlockSpec(shape, lambda i: (0,) * len(shape))

    grid_spec = pltpu.PrefetchScalarGridSpec(
        num_scalar_prefetch=0,
        grid=(1,),
        in_specs=[
            full_spec((S * B, 8 * H)),     # gx (time-major, gate-interleaved)
            full_spec((S * B, 2 * H)),     # activity mask
            full_spec((2 * H, 8 * H)),     # fused block-diagonal W_hh (bf16)
            full_spec((S * B, 1)),         # fill mask
            full_spec((2 * H, D1)), full_spec((1, D1)),   # MLP layer 1
            full_spec((D1, 2)), full_spec((1, 2)),        # MLP layer 2
        ],
        out_specs=[
            full_spec((S * B, 2 * H)),     # time-major bi-LSTM activations
            full_spec((S * B, 3)),         # packed head [prob, action, logp]
        ],
    )
    outs_tm, head_tm = pl.pallas_call(
        functools.partial(extract_kernel, batch=B, seq=S, hidden=H),
        out_shape=(jax.ShapeDtypeStruct((S * B, 2 * H), f32),
                   jax.ShapeDtypeStruct((S * B, 3), f32)),
        grid_spec=grid_spec,
        compiler_params=pltpu.CompilerParams(
            dimension_semantics=("arbitrary",)),
    )(gx, act, whh, fill, w1, b1, w2, b2)

    outs = outs_tm.reshape(S, B, 2 * H).transpose(1, 0, 2)     # (B, S, 2H)
    head = head_tm.reshape(S, B, 3).transpose(1, 0, 2)         # (B, S, 3)
    pred_prob = head[..., 0]
    pred_action = head[..., 1].astype(jnp.int32)
    log_prob_sum = head[..., 2].sum(-1)                        # tiny per-batch sum
    return outs, pred_prob, pred_action, log_prob_sum


# --------------------------------------------------------------------------
# Pure-JAX references (same numerics as the kernel: bf16 recurrent matmul,
# HIGHEST elsewhere, so the check validates structure, not MXU rounding).
# --------------------------------------------------------------------------
def lstm_reference(x_bse, lens, w_ih, w_hh, b, reverse):
    B, S, _ = x_bse.shape
    H = w_hh.shape[0]
    w_hh_bf = w_hh.astype(jnp.bfloat16)
    h = jnp.zeros((B, H), jnp.float32)
    c = jnp.zeros((B, H), jnp.float32)
    outs = jnp.zeros((B, S, H), jnp.float32)
    order = range(S - 1, -1, -1) if reverse else range(S)
    for t in order:
        gates = (_dot_hi(x_bse[:, t, :], w_ih) + b) + _dot_rec(h, w_hh_bf)
        i_g = jax.nn.sigmoid(gates[:, :H])
        f_g = jax.nn.sigmoid(gates[:, H:2 * H])
        g_g = jnp.tanh(gates[:, 2 * H:3 * H])
        o_g = jax.nn.sigmoid(gates[:, 3 * H:])
        c_new = f_g * c + i_g * g_g
        h_new = o_g * jnp.tanh(c_new)
        active = (t < lens)[:, None]
        c = jnp.where(active, c_new, c)
        h = jnp.where(active, h_new, h)
        outs = outs.at[:, t, :].set(jnp.where(active, h_new, 0.0))
    return outs


def head_reference(outs, fill, w1, b1, w2, b2):
    h1 = jnp.maximum(_dot_hi(outs, w1) + b1, 0.0)
    logits = _dot_hi(h1, w2) + b2
    p = jax.nn.softmax(logits, axis=-1)
    p = jnp.where(fill > 0.5, 1.0, p)
    pred_prob = p.max(-1)
    pred_action = (p[..., 1] > p[..., 0]).astype(jnp.int32)
    log_prob_sum = jnp.log(pred_prob + 1e-20).sum(-1)
    return pred_prob, pred_action, log_prob_sum


# --------------------------------------------------------------------------
# Glue: ragged x_hat compaction (mirrors the python loop in forward)
# --------------------------------------------------------------------------
def build_x_hat(ids_row, action_row, length):
    S = ids_row.shape[0]
    idx = jnp.arange(S)
    keep = (idx < length - 1) & (action_row == 0)
    key = jnp.where(keep, idx, idx + S)
    order = jnp.argsort(key)                 # kept indices first, in order
    gathered = ids_row[order]
    n_keep = jnp.sum(keep)
    return jnp.where(idx < n_keep, gathered,
                     jnp.where(idx == n_keep, EOS_ID, PAD_ID))


# --------------------------------------------------------------------------
# Main
# --------------------------------------------------------------------------
if __name__ == "__main__":
    key = jax.random.PRNGKey(0)
    ks = jax.random.split(key, 16)

    # ---- parameters (deterministic) --------------------------------------
    emb_table = 0.1 * jax.random.normal(ks[0], (VOCAB, EMBED), jnp.float32)
    emb_table = emb_table.at[PAD_ID].set(0.0)          # padding_idx

    def lstm_params(k):
        k1, k2, k3, k4 = jax.random.split(k, 4)
        w_ih = 0.1 * jax.random.normal(k1, (EMBED, 4 * HIDDEN), jnp.float32)
        w_hh = 0.1 * jax.random.normal(k2, (HIDDEN, 4 * HIDDEN), jnp.float32)
        b_ih = 0.1 * jax.random.normal(k3, (4 * HIDDEN,), jnp.float32)
        b_hh = 0.1 * jax.random.normal(k4, (4 * HIDDEN,), jnp.float32)
        return w_ih, w_hh, (b_ih + b_hh).reshape(1, 4 * HIDDEN)

    wf_ih, wf_hh, bf = lstm_params(ks[1])   # forward direction
    wb_ih, wb_hh, bb = lstm_params(ks[2])   # backward direction

    w1 = 0.1 * jax.random.normal(ks[3], (2 * HIDDEN, MLP_DIM), jnp.float32)
    b1 = 0.1 * jax.random.normal(ks[4], (1, MLP_DIM), jnp.float32)
    w2 = 0.1 * jax.random.normal(ks[5], (MLP_DIM, 2), jnp.float32)
    b2 = 0.1 * jax.random.normal(ks[6], (1, 2), jnp.float32)

    # ---- example batch ----------------------------------------------------
    code_lens = jnp.array([SEQ, 6], jnp.int32)
    toks = jax.random.randint(ks[7], (BATCH, SEQ), 3, VOCAB, jnp.int32)
    idx = jnp.arange(SEQ)[None, :]
    code_ids = jnp.where(idx == 0, BOS_ID,
                jnp.where(idx == code_lens[:, None] - 1, EOS_ID,
                 jnp.where(idx >= code_lens[:, None], PAD_ID, toks))).astype(jnp.int32)

    params = (emb_table, wf_ih, wf_hh, bf, wb_ih, wb_hh, bb, w1, b1, w2, b2)

    # ---- fused forward pass (single Pallas kernel) -------------------------
    outs, pred_prob, pred_action, log_prob_sum = extract_forward(
        code_ids, code_lens, params)

    # ragged token compaction (mirrors the python x_hat loop)
    x_hats = jax.vmap(build_x_hat)(code_ids, pred_action, code_lens)
    new_code_mask = (x_hats != PAD_ID)
    new_code_lens = new_code_mask.sum(-1)
    # TODO(synk): loss = log_prob_sum * generate_model.calculate(...), backward()
    # and the optimizer step involve an external model / autograd and are not
    # representable as a Pallas forward kernel.

    jax.block_until_ready((outs, pred_prob, pred_action, log_prob_sum,
                           x_hats, new_code_mask, new_code_lens))

    # ---- sanity check vs pure-JAX reference (same-precision recurrence) ----
    code_embed = emb_table[code_ids]
    ref_f = lstm_reference(code_embed, code_lens, wf_ih, wf_hh, bf, reverse=False)
    ref_b = lstm_reference(code_embed, code_lens, wb_ih, wb_hh, bb, reverse=True)
    ref_outs = jnp.concatenate([ref_f, ref_b], axis=-1)
    fill_bse1 = ((idx == 0) | (idx >= code_lens[:, None] - 1)
                 ).astype(jnp.float32)[:, :, None]
    ref_pp, ref_pa, ref_ls = head_reference(ref_outs, fill_bse1, w1, b1, w2, b2)

    # tolerances: kernel and reference share the bf16 recurrent matmul, so the
    # only residual differences are Mosaic-vs-XLA transcendental ulps.
    np.testing.assert_allclose(np.asarray(outs), np.asarray(ref_outs),
                               rtol=2e-5, atol=2e-5)
    np.testing.assert_allclose(np.asarray(pred_prob), np.asarray(ref_pp),
                               rtol=2e-5, atol=2e-5)
    np.testing.assert_array_equal(np.asarray(pred_action), np.asarray(ref_pa))
    np.testing.assert_allclose(np.asarray(log_prob_sum), np.asarray(ref_ls),
                               rtol=2e-5, atol=2e-5)

    print("KERNEL_OK")
</pallas_src>

<mosaic_0001>
module attributes {stable_mosaic.version = 11 : i64} {
  func.func @extract_kernel(%arg0: i32, %arg1: memref<16x256xf32, #tpu.memory_space<vmem>>, %arg2: memref<16x64xf32, #tpu.memory_space<vmem>>, %arg3: memref<64x256xbf16, #tpu.memory_space<vmem>>, %arg4: memref<16x1xf32, #tpu.memory_space<vmem>>, %arg5: memref<64x32xf32, #tpu.memory_space<vmem>>, %arg6: memref<1x32xf32, #tpu.memory_space<vmem>>, %arg7: memref<32x2xf32, #tpu.memory_space<vmem>>, %arg8: memref<1x2xf32, #tpu.memory_space<vmem>>, %arg9: memref<16x64xf32, #tpu.memory_space<vmem>>, %arg10: memref<16x3xf32, #tpu.memory_space<vmem>>) attributes {dimension_semantics = [#tpu.dimension_semantics<arbitrary>], iteration_bounds = array<i64: 1>, scalar_prefetch = 0 : i64, scratch_operands = 0 : i64, tpu.core_type = #tpu.core_type<tc>, window_params = [{pipeline_mode = #tpu.pipeline_mode<synchronous>, transform_indices = @transform_0, window_bounds = array<i64: 16, 256>}, {pipeline_mode = #tpu.pipeline_mode<synchronous>, transform_indices = @transform_1, window_bounds = array<i64: 16, 64>}, {pipeline_mode = #tpu.pipeline_mode<synchronous>, transform_indices = @transform_2, window_bounds = array<i64: 64, 256>}, {pipeline_mode = #tpu.pipeline_mode<synchronous>, transform_indices = @transform_3, window_bounds = array<i64: 16, 1>}, {pipeline_mode = #tpu.pipeline_mode<synchronous>, transform_indices = @transform_4, window_bounds = array<i64: 64, 32>}, {pipeline_mode = #tpu.pipeline_mode<synchronous>, transform_indices = @transform_5, window_bounds = array<i64: 1, 32>}, {pipeline_mode = #tpu.pipeline_mode<synchronous>, transform_indices = @transform_6, window_bounds = array<i64: 32, 2>}, {pipeline_mode = #tpu.pipeline_mode<synchronous>, transform_indices = @transform_7, window_bounds = array<i64: 1, 2>}, {pipeline_mode = #tpu.pipeline_mode<synchronous>, transform_indices = @transform_8, window_bounds = array<i64: 16, 64>}, {pipeline_mode = #tpu.pipeline_mode<synchronous>, transform_indices = @transform_9, window_bounds = array<i64: 16, 3>}]} {
    %c0 = arith.constant 0 : index
    %c0_0 = arith.constant 0 : index
    %0 = vector.load %arg1[%c0, %c0_0] : memref<16x256xf32, #tpu.memory_space<vmem>>, vector<16x256xf32>
    %c0_1 = arith.constant 0 : index
    %c0_2 = arith.constant 0 : index
    %1 = vector.load %arg3[%c0_1, %c0_2] : memref<64x256xbf16, #tpu.memory_space<vmem>>, vector<64x256xbf16>
    %c0_3 = arith.constant 0 : index
    %c0_4 = arith.constant 0 : index
    %2 = vector.load %arg2[%c0_3, %c0_4] : memref<16x64xf32, #tpu.memory_space<vmem>>, vector<16x64xf32>
    %cst = arith.constant 5.000000e-01 : f32
    %3 = vector.broadcast %cst : f32 to vector<16x64xf32>
    %4 = arith.cmpf ogt, %2, %3 : vector<16x64xf32>
    %cst_5 = arith.constant 0.000000e+00 : f32
    %5 = vector.broadcast %cst_5 : f32 to vector<2x64xf32>
    %cst_6 = arith.constant 0.000000e+00 : f32
    %6 = vector.broadcast %cst_6 : f32 to vector<2x64xf32>
    %7 = vector.extract_strided_slice %0 {offsets = [0, 0], sizes = [2, 256], strides = [1, 1]} : vector<16x256xf32> to vector<2x256xf32>
    %8 = arith.truncf %5 : vector<2x64xf32> to vector<2x64xbf16>
    %cst_7 = arith.constant dense<0.000000e+00> : vector<2x256xf32>
    %9 = tpu.matmul %8, %1, %cst_7 {dimension_numbers = #tpu.dot_dimension_numbers<[1], [0], [0], [1], [0, 0, 1, 1], [], []>} : vector<2x64xbf16>, vector<64x256xbf16>, vector<2x256xf32> -> vector<2x256xf32>
    %10 = arith.addf %7, %9 : vector<2x256xf32>
    %11 = vector.extract_strided_slice %10 {offsets = [0, 0], sizes = [2, 64], strides = [1, 1]} : vector<2x256xf32> to vector<2x64xf32>
    %12 = arith.negf %11 : vector<2x64xf32>
    %13 = math.exp %12 : vector<2x64xf32>
    %cst_8 = arith.constant 1.000000e+00 : f32
    %14 = vector.broadcast %cst_8 : f32 to vector<2x64xf32>
    %15 = arith.addf %14, %13 : vector<2x64xf32>
    %16 = arith.divf %14, %15 : vector<2x64xf32>
    %17 = vector.extract_strided_slice %10 {offsets = [0, 64], sizes = [2, 64], strides = [1, 1]} : vector<2x256xf32> to vector<2x64xf32>
    %18 = arith.negf %17 : vector<2x64xf32>
    %19 = math.exp %18 : vector<2x64xf32>
    %cst_9 = arith.constant 1.000000e+00 : f32
    %20 = vector.broadcast %cst_9 : f32 to vector<2x64xf32>
    %21 = arith.addf %20, %19 : vector<2x64xf32>
    %22 = arith.divf %20, %21 : vector<2x64xf32>
    %23 = vector.extract_strided_slice %10 {offsets = [0, 128], sizes = [2, 64], strides = [1, 1]} : vector<2x256xf32> to vector<2x64xf32>
    %24 = math.tanh %23 : vector<2x64xf32>
    %25 = vector.extract_strided_slice %10 {offsets = [0, 192], sizes = [2, 64], strides = [1, 1]} : vector<2x256xf32> to vector<2x64xf32>
    %26 = arith.negf %25 : vector<2x64xf32>
    %27 = math.exp %26 : vector<2x64xf32>
    %cst_10 = arith.constant 1.000000e+00 : f32
    %28 = vector.broadcast %cst_10 : f32 to vector<2x64xf32>
    %29 = arith.addf %28, %27 : vector<2x64xf32>
    %30 = arith.divf %28, %29 : vector<2x64xf32>
    %31 = arith.mulf %22, %6 : vector<2x64xf32>
    %32 = arith.mulf %16, %24 : vector<2x64xf32>
    %33 = arith.addf %31, %32 : vector<2x64xf32>
    %34 = math.tanh %33 : vector<2x64xf32>
    %35 = arith.mulf %30, %34 : vector<2x64xf32>
    %36 = vector.extract_strided_slice %4 {offsets = [0, 0], sizes = [2, 64], strides = [1, 1]} : vector<16x64xi1> to vector<2x64xi1>
    %37 = arith.select %36, %33, %6 : vector<2x64xi1>, vector<2x64xf32>
    %38 = arith.select %36, %35, %5 : vector<2x64xi1>, vector<2x64xf32>
    %cst_11 = arith.constant 0.000000e+00 : f32
    %39 = vector.broadcast %cst_11 : f32 to vector<2x64xf32>
    %40 = arith.select %36, %35, %39 : vector<2x64xi1>, vector<2x64xf32>
    %41 = vector.extract_strided_slice %40 {offsets = [0, 0], sizes = [2, 32], strides = [1, 1]} : vector<2x64xf32> to vector<2x32xf32>
    %c0_12 = arith.constant 0 : index
    %c0_13 = arith.constant 0 : index
    %42 = vector.load %arg9[%c0_12, %c0_13] : memref<16x64xf32, #tpu.memory_space<vmem>>, vector<2x32xf32>
    tpu.vector_store %arg9[%c0_12, %c0_13], %41 {strides = array<i32>} : memref<16x64xf32, #tpu.memory_space<vmem>>, vector<2x32xf32>,
    %43 = vector.extract_strided_slice %40 {offsets = [0, 32], sizes = [2, 32], strides = [1, 1]} : vector<2x64xf32> to vector<2x32xf32>
    %c14 = arith.constant 14 : index
    %c32 = arith.constant 32 : index
    %44 = vector.load %arg9[%c14, %c32] : memref<16x64xf32, #tpu.memory_space<vmem>>, vector<2x32xf32>
    tpu.vector_store %arg9[%c14, %c32], %43 {strides = array<i32>} : memref<16x64xf32, #tpu.memory_space<vmem>>, vector<2x32xf32>,
    %45 = vector.extract_strided_slice %0 {offsets = [2, 0], sizes = [2, 256], strides = [1, 1]} : vector<16x256xf32> to vector<2x256xf32>
    %46 = arith.truncf %38 : vector<2x64xf32> to vector<2x64xbf16>
    %cst_14 = arith.constant dense<0.000000e+00> : vector<2x256xf32>
    %47 = tpu.matmul %46, %1, %cst_14 {dimension_numbers = #tpu.dot_dimension_numbers<[1], [0], [0], [1], [0, 0, 1, 1], [], []>} : vector<2x64xbf16>, vector<64x256xbf16>, vector<2x256xf32> -> vector<2x256xf32>
    %48 = arith.addf %45, %47 : vector<2x256xf32>
    %49 = vector.extract_strided_slice %48 {offsets = [0, 0], sizes = [2, 64], strides = [1, 1]} : vector<2x256xf32> to vector<2x64xf32>
    %50 = arith.negf %49 : vector<2x64xf32>
    %51 = math.exp %50 : vector<2x64xf32>
    %cst_15 = arith.constant 1.000000e+00 : f32
    %52 = vector.broadcast %cst_15 : f32 to vector<2x64xf32>
    %53 = arith.addf %52, %51 : vector<2x64xf32>
    %54 = arith.divf %52, %53 : vector<2x64xf32>
    %55 = vector.extract_strided_slice %48 {offsets = [0, 64], sizes = [2, 64], strides = [1, 1]} : vector<2x256xf32> to vector<2x64xf32>
    %56 = arith.negf %55 : vector<2x64xf32>
    %57 = math.exp %56 : vector<2x64xf32>
    %cst_16 = arith.constant 1.000000e+00 : f32
    %58 = vector.broadcast %cst_16 : f32 to vector<2x64xf32>
    %59 = arith.addf %58, %57 : vector<2x64xf32>
    %60 = arith.divf %58, %59 : vector<2x64xf32>
    %61 = vector.extract_strided_slice %48 {offsets = [0, 128], sizes = [2, 64], strides = [1, 1]} : vector<2x256xf32> to vector<2x64xf32>
    %62 = math.tanh %61 : vector<2x64xf32>
    %63 = vector.extract_strided_slice %48 {offsets = [0, 192], sizes = [2, 64], strides = [1, 1]} : vector<2x256xf32> to vector<2x64xf32>
    %64 = arith.negf %63 : vector<2x64xf32>
    %65 = math.exp %64 : vector<2x64xf32>
    %cst_17 = arith.constant 1.000000e+00 : f32
    %66 = vector.broadcast %cst_17 : f32 to vector<2x64xf32>
    %67 = arith.addf %66, %65 : vector<2x64xf32>
    %68 = arith.divf %66, %67 : vector<2x64xf32>
    %69 = arith.mulf %60, %37 : vector<2x64xf32>
    %70 = arith.mulf %54, %62 : vector<2x64xf32>
    %71 = arith.addf %69, %70 : vector<2x64xf32>
    %72 = math.tanh %71 : vector<2x64xf32>
    %73 = arith.mulf %68, %72 : vector<2x64xf32>
    %74 = vector.extract_strided_slice %4 {offsets = [2, 0], sizes = [2, 64], strides = [1, 1]} : vector<16x64xi1> to vector<2x64xi1>
    %75 = arith.select %74, %71, %37 : vector<2x64xi1>, vector<2x64xf32>
    %76 = arith.select %74, %73, %38 : vector<2x64xi1>, vector<2x64xf32>
    %cst_18 = arith.constant 0.000000e+00 : f32
    %77 = vector.broadcast %cst_18 : f32 to vector<2x64xf32>
    %78 = arith.select %74, %73, %77 : vector<2x64xi1>, vector<2x64xf32>
    %79 = vector.extract_strided_slice %78 {offsets = [0, 0], sizes = [2, 32], strides = [1, 1]} : vector<2x64xf32> to vector<2x32xf32>
    %c2 = arith.constant 2 : index
    %c0_19 = arith.constant 0 : index
    %80 = vector.load %arg9[%c2, %c0_19] : memref<16x64xf32, #tpu.memory_space<vmem>>, vector<2x32xf32>
    tpu.vector_store %arg9[%c2, %c0_19], %79 {strides = array<i32>} : memref<16x64xf32, #tpu.memory_space<vmem>>, vector<2x32xf32>,
    %81 = vector.extract_strided_slice %78 {offsets = [0, 32], sizes = [2, 32], strides = [1, 1]} : vector<2x64xf32> to vector<2x32xf32>
    %c12 = arith.constant 12 : index
    %c32_20 = arith.constant 32 : index
    %82 = vector.load %arg9[%c12, %c32_20] : memref<16x64xf32, #tpu.memory_space<vmem>>, vector<2x32xf32>
    tpu.vector_store %arg9[%c12, %c32_20], %81 {strides = array<i32>} : memref<16x64xf32, #tpu.memory_space<vmem>>, vector<2x32xf32>,
    %83 = vector.extract_strided_slice %0 {offsets = [4, 0], sizes = [2, 256], strides = [1, 1]} : vector<16x256xf32> to vector<2x256xf32>
    %84 = arith.truncf %76 : vector<2x64xf32> to vector<2x64xbf16>
    %cst_21 = arith.constant dense<0.000000e+00> : vector<2x256xf32>
    %85 = tpu.matmul %84, %1, %cst_21 {dimension_numbers = #tpu.dot_dimension_numbers<[1], [0], [0], [1], [0, 0, 1, 1], [], []>} : vector<2x64xbf16>, vector<64x256xbf16>, vector<2x256xf32> -> vector<2x256xf32>
    %86 = arith.addf %83, %85 : vector<2x256xf32>
    %87 = vector.extract_strided_slice %86 {offsets = [0, 0], sizes = [2, 64], strides = [1, 1]} : vector<2x256xf32> to vector<2x64xf32>
    %88 = arith.negf %87 : vector<2x64xf32>
    %89 = math.exp %88 : vector<2x64xf32>
    %cst_22 = arith.constant 1.000000e+00 : f32
    %90 = vector.broadcast %cst_22 : f32 to vector<2x64xf32>
    %91 = arith.addf %90, %89 : vector<2x64xf32>
    %92 = arith.divf %90, %91 : vector<2x64xf32>
    %93 = vector.extract_strided_slice %86 {offsets = [0, 64], sizes = [2, 64], strides = [1, 1]} : vector<2x256xf32> to vector<2x64xf32>
    %94 = arith.negf %93 : vector<2x64xf32>
    %95 = math.exp %94 : vector<2x64xf32>
    %cst_23 = arith.constant 1.000000e+00 : f32
    %96 = vector.broadcast %cst_23 : f32 to vector<2x64xf32>
    %97 = arith.addf %96, %95 : vector<2x64xf32>
    %98 = arith.divf %96, %97 : vector<2x64xf32>
    %99 = vector.extract_strided_slice %86 {offsets = [0, 128], sizes = [2, 64], strides = [1, 1]} : vector<2x256xf32> to vector<2x64xf32>
    %100 = math.tanh %99 : vector<2x64xf32>
    %101 = vector.extract_strided_slice %86 {offsets = [0, 192], sizes = [2, 64], strides = [1, 1]} : vector<2x256xf32> to vector<2x64xf32>
    %102 = arith.negf %101 : vector<2x64xf32>
    %103 = math.exp %102 : vector<2x64xf32>
    %cst_24 = arith.constant 1.000000e+00 : f32
    %104 = vector.broadcast %cst_24 : f32 to vector<2x64xf32>
    %105 = arith.addf %104, %103 : vector<2x64xf32>
    %106 = arith.divf %104, %105 : vector<2x64xf32>
    %107 = arith.mulf %98, %75 : vector<2x64xf32>
    %108 = arith.mulf %92, %100 : vector<2x64xf32>
    %109 = arith.addf %107, %108 : vector<2x64xf32>
    %110 = math.tanh %109 : vector<2x64xf32>
    %111 = arith.mulf %106, %110 : vector<2x64xf32>
    %112 = vector.extract_strided_slice %4 {offsets = [4, 0], sizes = [2, 64], strides = [1, 1]} : vector<16x64xi1> to vector<2x64xi1>
    %113 = arith.select %112, %109, %75 : vector<2x64xi1>, vector<2x64xf32>
    %114 = arith.select %112, %111, %76 : vector<2x64xi1>, vector<2x64xf32>
    %cst_25 = arith.constant 0.000000e+00 : f32
    %115 = vector.broadcast %cst_25 : f32 to vector<2x64xf32>
    %116 = arith.select %112, %111, %115 : vector<2x64xi1>, vector<2x64xf32>
    %117 = vector.extract_strided_slice %116 {offsets = [0, 0], sizes = [2, 32], strides = [1, 1]} : vector<2x64xf32> to vector<2x32xf32>
    %c4 = arith.constant 4 : index
    %c0_26 = arith.constant 0 : index
    %118 = vector.load %arg9[%c4, %c0_26] : memref<16x64xf32, #tpu.memory_space<vmem>>, vector<2x32xf32>
    tpu.vector_store %arg9[%c4, %c0_26], %117 {strides = array<i32>} : memref<16x64xf32, #tpu.memory_space<vmem>>, vector<2x32xf32>,
    %119 = vector.extract_strided_slice %116 {offsets = [0, 32], sizes = [2, 32], strides = [1, 1]} : vector<2x64xf32> to vector<2x32xf32>
    %c10 = arith.constant 10 : index
    %c32_27 = arith.constant 32 : index
    %120 = vector.load %arg9[%c10, %c32_27] : memref<16x64xf32, #tpu.memory_space<vmem>>, vector<2x32xf32>
    tpu.vector_store %arg9[%c10, %c32_27], %119 {strides = array<i32>} : memref<16x64xf32, #tpu.memory_space<vmem>>, vector<2x32xf32>,
    %121 = vector.extract_strided_slice %0 {offsets = [6, 0], sizes = [2, 256], strides = [1, 1]} : vector<16x256xf32> to vector<2x256xf32>
    %122 = arith.truncf %114 : vector<2x64xf32> to vector<2x64xbf16>
    %cst_28 = arith.constant dense<0.000000e+00> : vector<2x256xf32>
    %123 = tpu.matmul %122, %1, %cst_28 {dimension_numbers = #tpu.dot_dimension_numbers<[1], [0], [0], [1], [0, 0, 1, 1], [], []>} : vector<2x64xbf16>, vector<64x256xbf16>, vector<2x256xf32> -> vector<2x256xf32>
    %124 = arith.addf %121, %123 : vector<2x256xf32>
    %125 = vector.extract_strided_slice %124 {offsets = [0, 0], sizes = [2, 64], strides = [1, 1]} : vector<2x256xf32> to vector<2x64xf32>
    %126 = arith.negf %125 : vector<2x64xf32>
    %127 = math.exp %126 : vector<2x64xf32>
    %cst_29 = arith.constant 1.000000e+00 : f32
    %128 = vector.broadcast %cst_29 : f32 to vector<2x64xf32>
    %129 = arith.addf %128, %127 : vector<2x64xf32>
    %130 = arith.divf %128, %129 : vector<2x64xf32>
    %131 = vector.extract_strided_slice %124 {offsets = [0, 64], sizes = [2, 64], strides = [1, 1]} : vector<2x256xf32> to vector<2x64xf32>
    %132 = arith.negf %131 : vector<2x64xf32>
    %133 = math.exp %132 : vector<2x64xf32>
    %cst_30 = arith.constant 1.000000e+00 : f32
    %134 = vector.broadcast %cst_30 : f32 to vector<2x64xf32>
    %135 = arith.addf %134, %133 : vector<2x64xf32>
    %136 = arith.divf %134, %135 : vector<2x64xf32>
    %137 = vector.extract_strided_slice %124 {offsets = [0, 128], sizes = [2, 64], strides = [1, 1]} : vector<2x256xf32> to vector<2x64xf32>
    %138 = math.tanh %137 : vector<2x64xf32>
    %139 = vector.extract_strided_slice %124 {offsets = [0, 192], sizes = [2, 64], strides = [1, 1]} : vector<2x256xf32> to vector<2x64xf32>
    %140 = arith.negf %139 : vector<2x64xf32>
    %141 = math.exp %140 : vector<2x64xf32>
    %cst_31 = arith.constant 1.000000e+00 : f32
    %142 = vector.broadcast %cst_31 : f32 to vector<2x64xf32>
    %143 = arith.addf %142, %141 : vector<2x64xf32>
    %144 = arith.divf %142, %143 : vector<2x64xf32>
    %145 = arith.mulf %136, %113 : vector<2x64xf32>
    %146 = arith.mulf %130, %138 : vector<2x64xf32>
    %147 = arith.addf %145, %146 : vector<2x64xf32>
    %148 = math.tanh %147 : vector<2x64xf32>
    %149 = arith.mulf %144, %148 : vector<2x64xf32>
    %150 = vector.extract_strided_slice %4 {offsets = [6, 0], sizes = [2, 64], strides = [1, 1]} : vector<16x64xi1> to vector<2x64xi1>
    %151 = arith.select %150, %147, %113 : vector<2x64xi1>, vector<2x64xf32>
    %152 = arith.select %150, %149, %114 : vector<2x64xi1>, vector<2x64xf32>
    %cst_32 = arith.constant 0.000000e+00 : f32
    %153 = vector.broadcast %cst_32 : f32 to vector<2x64xf32>
    %154 = arith.select %150, %149, %153 : vector<2x64xi1>, vector<2x64xf32>
    %155 = vector.extract_strided_slice %154 {offsets = [0, 0], sizes = [2, 32], strides = [1, 1]} : vector<2x64xf32> to vector<2x32xf32>
    %c6 = arith.constant 6 : index
    %c0_33 = arith.constant 0 : index
    %156 = vector.load %arg9[%c6, %c0_33] : memref<16x64xf32, #tpu.memory_space<vmem>>, vector<2x32xf32>
    tpu.vector_store %arg9[%c6, %c0_33], %155 {strides = array<i32>} : memref<16x64xf32, #tpu.memory_space<vmem>>, vector<2x32xf32>,
    %157 = vector.extract_strided_slice %154 {offsets = [0, 32], sizes = [2, 32], strides = [1, 1]} : vector<2x64xf32> to vector<2x32xf32>
    %c8 = arith.constant 8 : index
    %c32_34 = arith.constant 32 : index
    %158 = vector.load %arg9[%c8, %c32_34] : memref<16x64xf32, #tpu.memory_space<vmem>>, vector<2x32xf32>
    tpu.vector_store %arg9[%c8, %c32_34], %157 {strides = array<i32>} : memref<16x64xf32, #tpu.memory_space<vmem>>, vector<2x32xf32>,
    %159 = vector.extract_strided_slice %0 {offsets = [8, 0], sizes = [2, 256], strides = [1, 1]} : vector<16x256xf32> to vector<2x256xf32>
    %160 = arith.truncf %152 : vector<2x64xf32> to vector<2x64xbf16>
    %cst_35 = arith.constant dense<0.000000e+00> : vector<2x256xf32>
    %161 = tpu.matmul %160, %1, %cst_35 {dimension_numbers = #tpu.dot_dimension_numbers<[1], [0], [0], [1], [0, 0, 1, 1], [], []>} : vector<2x64xbf16>, vector<64x256xbf16>, vector<2x256xf32> -> vector<2x256xf32>
    %162 = arith.addf %159, %161 : vector<2x256xf32>
    %163 = vector.extract_strided_slice %162 {offsets = [0, 0], sizes = [2, 64], strides = [1, 1]} : vector<2x256xf32> to vector<2x64xf32>
    %164 = arith.negf %163 : vector<2x64xf32>
    %165 = math.exp %164 : vector<2x64xf32>
    %cst_36 = arith.constant 1.000000e+00 : f32
    %166 = vector.broadcast %cst_36 : f32 to vector<2x64xf32>
    %167 = arith.addf %166, %165 : vector<2x64xf32>
    %168 = arith.divf %166, %167 : vector<2x64xf32>
    %169 = vector.extract_strided_slice %162 {offsets = [0, 64], sizes = [2, 64], strides = [1, 1]} : vector<2x256xf32> to vector<2x64xf32>
    %170 = arith.negf %169 : vector<2x64xf32>
    %171 = math.exp %170 : vector<2x64xf32>
    %cst_37 = arith.constant 1.000000e+00 : f32
    %172 = vector.broadcast %cst_37 : f32 to vector<2x64xf32>
    %173 = arith.addf %172, %171 : vector<2x64xf32>
    %174 = arith.divf %172, %173 : vector<2x64xf32>
    %175 = vector.extract_strided_slice %162 {offsets = [0, 128], sizes = [2, 64], strides = [1, 1]} : vector<2x256xf32> to vector<2x64xf32>
    %176 = math.tanh %175 : vector<2x64xf32>
    %177 = vector.extract_strided_slice %162 {offsets = [0, 192], sizes = [2, 64], strides = [1, 1]} : vector<2x256xf32> to vector<2x64xf32>
    %178 = arith.negf %177 : vector<2x64xf32>
    %179 = math.exp %178 : vector<2x64xf32>
    %cst_38 = arith.constant 1.000000e+00 : f32
    %180 = vector.broadcast %cst_38 : f32 to vector<2x64xf32>
    %181 = arith.addf %180, %179 : vector<2x64xf32>
    %182 = arith.divf %180, %181 : vector<2x64xf32>
    %183 = arith.mulf %174, %151 : vector<2x64xf32>
    %184 = arith.mulf %168, %176 : vector<2x64xf32>
    %185 = arith.addf %183, %184 : vector<2x64xf32>
    %186 = math.tanh %185 : vector<2x64xf32>
    %187 = arith.mulf %182, %186 : vector<2x64xf32>
    %188 = vector.extract_strided_slice %4 {offsets = [8, 0], sizes = [2, 64], strides = [1, 1]} : vector<16x64xi1> to vector<2x64xi1>
    %189 = arith.select %188, %185, %151 : vector<2x64xi1>, vector<2x64xf32>
    %190 = arith.select %188, %187, %152 : vector<2x64xi1>, vector<2x64xf32>
    %cst_39 = arith.constant 0.000000e+00 : f32
    %191 = vector.broadcast %cst_39 : f32 to vector<2x64xf32>
    %192 = arith.select %188, %187, %191 : vector<2x64xi1>, vector<2x64xf32>
    %193 = vector.extract_strided_slice %192 {offsets = [0, 0], sizes = [2, 32], strides = [1, 1]} : vector<2x64xf32> to vector<2x32xf32>
    %c8_40 = arith.constant 8 : index
    %c0_41 = arith.constant 0 : index
    %194 = vector.load %arg9[%c8_40, %c0_41] : memref<16x64xf32, #tpu.memory_space<vmem>>, vector<2x32xf32>
    tpu.vector_store %arg9[%c8_40, %c0_41], %193 {strides = array<i32>} : memref<16x64xf32, #tpu.memory_space<vmem>>, vector<2x32xf32>,
    %195 = vector.extract_strided_slice %192 {offsets = [0, 32], sizes = [2, 32], strides = [1, 1]} : vector<2x64xf32> to vector<2x32xf32>
    %c6_42 = arith.constant 6 : index
    %c32_43 = arith.constant 32 : index
    %196 = vector.load %arg9[%c6_42, %c32_43] : memref<16x64xf32, #tpu.memory_space<vmem>>, vector<2x32xf32>
    tpu.vector_store %arg9[%c6_42, %c32_43], %195 {strides = array<i32>} : memref<16x64xf32, #tpu.memory_space<vmem>>, vector<2x32xf32>,
    %197 = vector.extract_strided_slice %0 {offsets = [10, 0], sizes = [2, 256], strides = [1, 1]} : vector<16x256xf32> to vector<2x256xf32>
    %198 = arith.truncf %190 : vector<2x64xf32> to vector<2x64xbf16>
    %cst_44 = arith.constant dense<0.000000e+00> : vector<2x256xf32>
    %199 = tpu.matmul %198, %1, %cst_44 {dimension_numbers = #tpu.dot_dimension_numbers<[1], [0], [0], [1], [0, 0, 1, 1], [], []>} : vector<2x64xbf16>, vector<64x256xbf16>, vector<2x256xf32> -> vector<2x256xf32>
    %200 = arith.addf %197, %199 : vector<2x256xf32>
    %201 = vector.extract_strided_slice %200 {offsets = [0, 0], sizes = [2, 64], strides = [1, 1]} : vector<2x256xf32> to vector<2x64xf32>
    %202 = arith.negf %201 : vector<2x64xf32>
    %203 = math.exp %202 : vector<2x64xf32>
    %cst_45 = arith.constant 1.000000e+00 : f32
    %204 = vector.broadcast %cst_45 : f32 to vector<2x64xf32>
    %205 = arith.addf %204, %203 : vector<2x64xf32>
    %206 = arith.divf %204, %205 : vector<2x64xf32>
    %207 = vector.extract_strided_slice %200 {offsets = [0, 64], sizes = [2, 64], strides = [1, 1]} : vector<2x256xf32> to vector<2x64xf32>
    %208 = arith.negf %207 : vector<2x64xf32>
    %209 = math.exp %208 : vector<2x64xf32>
    %cst_46 = arith.constant 1.000000e+00 : f32
    %210 = vector.broadcast %cst_46 : f32 to vector<2x64xf32>
    %211 = arith.addf %210, %209 : vector<2x64xf32>
    %212 = arith.divf %210, %211 : vector<2x64xf32>
    %213 = vector.extract_strided_slice %200 {offsets = [0, 128], sizes = [2, 64], strides = [1, 1]} : vector<2x256xf32> to vector<2x64xf32>
    %214 = math.tanh %213 : vector<2x64xf32>
    %215 = vector.extract_strided_slice %200 {offsets = [0, 192], sizes = [2, 64], strides = [1, 1]} : vector<2x256xf32> to vector<2x64xf32>
    %216 = arith.negf %215 : vector<2x64xf32>
    %217 = math.exp %216 : vector<2x64xf32>
    %cst_47 = arith.constant 1.000000e+00 : f32
    %218 = vector.broadcast %cst_47 : f32 to vector<2x64xf32>
    %219 = arith.addf %218, %217 : vector<2x64xf32>
    %220 = arith.divf %218, %219 : vector<2x64xf32>
    %221 = arith.mulf %212, %189 : vector<2x64xf32>
    %222 = arith.mulf %206, %214 : vector<2x64xf32>
    %223 = arith.addf %221, %222 : vector<2x64xf32>
    %224 = math.tanh %223 : vector<2x64xf32>
    %225 = arith.mulf %220, %224 : vector<2x64xf32>
    %226 = vector.extract_strided_slice %4 {offsets = [10, 0], sizes = [2, 64], strides = [1, 1]} : vector<16x64xi1> to vector<2x64xi1>
    %227 = arith.select %226, %223, %189 : vector<2x64xi1>, vector<2x64xf32>
    %228 = arith.select %226, %225, %190 : vector<2x64xi1>, vector<2x64xf32>
    %cst_48 = arith.constant 0.000000e+00 : f32
    %229 = vector.broadcast %cst_48 : f32 to vector<2x64xf32>
    %230 = arith.select %226, %225, %229 : vector<2x64xi1>, vector<2x64xf32>
    %231 = vector.extract_strided_slice %230 {offsets = [0, 0], sizes = [2, 32], strides = [1, 1]} : vector<2x64xf32> to vector<2x32xf32>
    %c10_49 = arith.constant 10 : index
    %c0_50 = arith.constant 0 : index
    %232 = vector.load %arg9[%c10_49, %c0_50] : memref<16x64xf32, #tpu.memory_space<vmem>>, vector<2x32xf32>
    tpu.vector_store %arg9[%c10_49, %c0_50], %231 {strides = array<i32>} : memref<16x64xf32, #tpu.memory_space<vmem>>, vector<2x32xf32>,
    %233 = vector.extract_strided_slice %230 {offsets = [0, 32], sizes = [2, 32], strides = [1, 1]} : vector<2x64xf32> to vector<2x32xf32>
    %c4_51 = arith.constant 4 : index
    %c32_52 = arith.constant 32 : index
    %234 = vector.load %arg9[%c4_51, %c32_52] : memref<16x64xf32, #tpu.memory_space<vmem>>, vector<2x32xf32>
    tpu.vector_store %arg9[%c4_51, %c32_52], %233 {strides = array<i32>} : memref<16x64xf32, #tpu.memory_space<vmem>>, vector<2x32xf32>,
    %235 = vector.extract_strided_slice %0 {offsets = [12, 0], sizes = [2, 256], strides = [1, 1]} : vector<16x256xf32> to vector<2x256xf32>
    %236 = arith.truncf %228 : vector<2x64xf32> to vector<2x64xbf16>
    %cst_53 = arith.constant dense<0.000000e+00> : vector<2x256xf32>
    %237 = tpu.matmul %236, %1, %cst_53 {dimension_numbers = #tpu.dot_dimension_numbers<[1], [0], [0], [1], [0, 0, 1, 1], [], []>} : vector<2x64xbf16>, vector<64x256xbf16>, vector<2x256xf32> -> vector<2x256xf32>
    %238 = arith.addf %235, %237 : vector<2x256xf32>
    %239 = vector.extract_strided_slice %238 {offsets = [0, 0], sizes = [2, 64], strides = [1, 1]} : vector<2x256xf32> to vector<2x64xf32>
    %240 = arith.negf %239 : vector<2x64xf32>
    %241 = math.exp %240 : vector<2x64xf32>
    %cst_54 = arith.constant 1.000000e+00 : f32
    %242 = vector.broadcast %cst_54 : f32 to vector<2x64xf32>
    %243 = arith.addf %242, %241 : vector<2x64xf32>
    %244 = arith.divf %242, %243 : vector<2x64xf32>
    %245 = vector.extract_strided_slice %238 {offsets = [0, 64], sizes = [2, 64], strides = [1, 1]} : vector<2x256xf32> to vector<2x64xf32>
    %246 = arith.negf %245 : vector<2x64xf32>
    %247 = math.exp %246 : vector<2x64xf32>
    %cst_55 = arith.constant 1.000000e+00 : f32
    %248 = vector.broadcast %cst_55 : f32 to vector<2x64xf32>
    %249 = arith.addf %248, %247 : vector<2x64xf32>
    %250 = arith.divf %248, %249 : vector<2x64xf32>
    %251 = vector.extract_strided_slice %238 {offsets = [0, 128], sizes = [2, 64], strides = [1, 1]} : vector<2x256xf32> to vector<2x64xf32>
    %252 = math.tanh %251 : vector<2x64xf32>
    %253 = vector.extract_strided_slice %238 {offsets = [0, 192], sizes = [2, 64], strides = [1, 1]} : vector<2x256xf32> to vector<2x64xf32>
    %254 = arith.negf %253 : vector<2x64xf32>
    %255 = math.exp %254 : vector<2x64xf32>
    %cst_56 = arith.constant 1.000000e+00 : f32
    %256 = vector.broadcast %cst_56 : f32 to vector<2x64xf32>
    %257 = arith.addf %256, %255 : vector<2x64xf32>
    %258 = arith.divf %256, %257 : vector<2x64xf32>
    %259 = arith.mulf %250, %227 : vector<2x64xf32>
    %260 = arith.mulf %244, %252 : vector<2x64xf32>
    %261 = arith.addf %259, %260 : vector<2x64xf32>
    %262 = math.tanh %261 : vector<2x64xf32>
    %263 = arith.mulf %258, %262 : vector<2x64xf32>
    %264 = vector.extract_strided_slice %4 {offsets = [12, 0], sizes = [2, 64], strides = [1, 1]} : vector<16x64xi1> to vector<2x64xi1>
    %265 = arith.select %264, %261, %227 : vector<2x64xi1>, vector<2x64xf32>
    %266 = arith.select %264, %263, %228 : vector<2x64xi1>, vector<2x64xf32>
    %cst_57 = arith.constant 0.000000e+00 : f32
    %267 = vector.broadcast %cst_57 : f32 to vector<2x64xf32>
    %268 = arith.select %264, %263, %267 : vector<2x64xi1>, vector<2x64xf32>
    %269 = vector.extract_strided_slice %268 {offsets = [0, 0], sizes = [2, 32], strides = [1, 1]} : vector<2x64xf32> to vector<2x32xf32>
    %c12_58 = arith.constant 12 : index
    %c0_59 = arith.constant 0 : index
    %270 = vector.load %arg9[%c12_58, %c0_59] : memref<16x64xf32, #tpu.memory_space<vmem>>, vector<2x32xf32>
    tpu.vector_store %arg9[%c12_58, %c0_59], %269 {strides = array<i32>} : memref<16x64xf32, #tpu.memory_space<vmem>>, vector<2x32xf32>,
    %271 = vector.extract_strided_slice %268 {offsets = [0, 32], sizes = [2, 32], strides = [1, 1]} : vector<2x64xf32> to vector<2x32xf32>
    %c2_60 = arith.constant 2 : index
    %c32_61 = arith.constant 32 : index
    %272 = vector.load %arg9[%c2_60, %c32_61] : memref<16x64xf32, #tpu.memory_space<vmem>>, vector<2x32xf32>
    tpu.vector_store %arg9[%c2_60, %c32_61], %271 {strides = array<i32>} : memref<16x64xf32, #tpu.memory_space<vmem>>, vector<2x32xf32>,
    %273 = vector.extract_strided_slice %0 {offsets = [14, 0], sizes = [2, 256], strides = [1, 1]} : vector<16x256xf32> to vector<2x256xf32>
    %274 = arith.truncf %266 : vector<2x64xf32> to vector<2x64xbf16>
    %cst_62 = arith.constant dense<0.000000e+00> : vector<2x256xf32>
    %275 = tpu.matmul %274, %1, %cst_62 {dimension_numbers = #tpu.dot_dimension_numbers<[1], [0], [0], [1], [0, 0, 1, 1], [], []>} : vector<2x64xbf16>, vector<64x256xbf16>, vector<2x256xf32> -> vector<2x256xf32>
    %276 = arith.addf %273, %275 : vector<2x256xf32>
    %277 = vector.extract_strided_slice %276 {offsets = [0, 0], sizes = [2, 64], strides = [1, 1]} : vector<2x256xf32> to vector<2x64xf32>
    %278 = arith.negf %277 : vector<2x64xf32>
    %279 = math.exp %278 : vector<2x64xf32>
    %cst_63 = arith.constant 1.000000e+00 : f32
    %280 = vector.broadcast %cst_63 : f32 to vector<2x64xf32>
    %281 = arith.addf %280, %279 : vector<2x64xf32>
    %282 = arith.divf %280, %281 : vector<2x64xf32>
    %283 = vector.extract_strided_slice %276 {offsets = [0, 64], sizes = [2, 64], strides = [1, 1]} : vector<2x256xf32> to vector<2x64xf32>
    %284 = arith.negf %283 : vector<2x64xf32>
    %285 = math.exp %284 : vector<2x64xf32>
    %cst_64 = arith.constant 1.000000e+00 : f32
    %286 = vector.broadcast %cst_64 : f32 to vector<2x64xf32>
    %287 = arith.addf %286, %285 : vector<2x64xf32>
    %288 = arith.divf %286, %287 : vector<2x64xf32>
    %289 = vector.extract_strided_slice %276 {offsets = [0, 128], sizes = [2, 64], strides = [1, 1]} : vector<2x256xf32> to vector<2x64xf32>
    %290 = math.tanh %289 : vector<2x64xf32>
    %291 = vector.extract_strided_slice %276 {offsets = [0, 192], sizes = [2, 64], strides = [1, 1]} : vector<2x256xf32> to vector<2x64xf32>
    %292 = arith.negf %291 : vector<2x64xf32>
    %293 = math.exp %292 : vector<2x64xf32>
    %cst_65 = arith.constant 1.000000e+00 : f32
    %294 = vector.broadcast %cst_65 : f32 to vector<2x64xf32>
    %295 = arith.addf %294, %293 : vector<2x64xf32>
    %296 = arith.divf %294, %295 : vector<2x64xf32>
    %297 = arith.mulf %288, %265 : vector<2x64xf32>
    %298 = arith.mulf %282, %290 : vector<2x64xf32>
    %299 = arith.addf %297, %298 : vector<2x64xf32>
    %300 = math.tanh %299 : vector<2x64xf32>
    %301 = arith.mulf %296, %300 : vector<2x64xf32>
    %302 = vector.extract_strided_slice %4 {offsets = [14, 0], sizes = [2, 64], strides = [1, 1]} : vector<16x64xi1> to vector<2x64xi1>
    %cst_66 = arith.constant 0.000000e+00 : f32
    %303 = vector.broadcast %cst_66 : f32 to vector<2x64xf32>
    %304 = arith.select %302, %301, %303 : vector<2x64xi1>, vector<2x64xf32>
    %305 = vector.extract_strided_slice %304 {offsets = [0, 0], sizes = [2, 32], strides = [1, 1]} : vector<2x64xf32> to vector<2x32xf32>
    %c14_67 = arith.constant 14 : index
    %c0_68 = arith.constant 0 : index
    %306 = vector.load %arg9[%c14_67, %c0_68] : memref<16x64xf32, #tpu.memory_space<vmem>>, vector<2x32xf32>
    tpu.vector_store %arg9[%c14_67, %c0_68], %305 {strides = array<i32>} : memref<16x64xf32, #tpu.memory_space<vmem>>, vector<2x32xf32>,
    %307 = vector.extract_strided_slice %304 {offsets = [0, 32], sizes = [2, 32], strides = [1, 1]} : vector<2x64xf32> to vector<2x32xf32>
    %c0_69 = arith.constant 0 : index
    %c32_70 = arith.constant 32 : index
    %308 = vector.load %arg9[%c0_69, %c32_70] : memref<16x64xf32, #tpu.memory_space<vmem>>, vector<2x32xf32>
    tpu.vector_store %arg9[%c0_69, %c32_70], %307 {strides = array<i32>} : memref<16x64xf32, #tpu.memory_space<vmem>>, vector<2x32xf32>,
    %c0_71 = arith.constant 0 : index
    %c0_72 = arith.constant 0 : index
    %309 = vector.load %arg9[%c0_71, %c0_72] : memref<16x64xf32, #tpu.memory_space<vmem>>, vector<16x64xf32>
    %c0_73 = arith.constant 0 : index
    %c0_74 = arith.constant 0 : index
    %310 = vector.load %arg5[%c0_73, %c0_74] : memref<64x32xf32, #tpu.memory_space<vmem>>, vector<64x32xf32>
    %cst_75 = arith.constant dense<0.000000e+00> : vector<16x32xf32>
    %311 = tpu.matmul %309, %310, %cst_75 {dimension_numbers = #tpu.dot_dimension_numbers<[1], [0], [0], [1], [0, 0, 1, 1], [], []>, precision = #tpu.contract_precision<fp32>} : vector<16x64xf32>, vector<64x32xf32>, vector<16x32xf32> -> vector<16x32xf32>
    %c0_76 = arith.constant 0 : index
    %c0_77 = arith.constant 0 : index
    %312 = vector.load %arg6[%c0_76, %c0_77] : memref<1x32xf32, #tpu.memory_space<vmem>>, vector<1x32xf32>
    %313 = vector.broadcast %312 : vector<1x32xf32> to vector<16x32xf32>
    %314 = arith.addf %311, %313 : vector<16x32xf32>
    %cst_78 = arith.constant 0.000000e+00 : f32
    %315 = vector.broadcast %cst_78 : f32 to vector<16x32xf32>
    %316 = arith.maximumf %314, %315 : vector<16x32xf32>
    %c0_79 = arith.constant 0 : index
    %c0_80 = arith.constant 0 : index
    %317 = vector.load %arg7[%c0_79, %c0_80] : memref<32x2xf32, #tpu.memory_space<vmem>>, vector<32x2xf32>
    %cst_81 = arith.constant dense<0.000000e+00> : vector<16x2xf32>
    %318 = tpu.matmul %316, %317, %cst_81 {dimension_numbers = #tpu.dot_dimension_numbers<[1], [0], [0], [1], [0, 0, 1, 1], [], []>, precision = #tpu.contract_precision<fp32>} : vector<16x32xf32>, vector<32x2xf32>, vector<16x2xf32> -> vector<16x2xf32>
    %c0_82 = arith.constant 0 : index
    %c0_83 = arith.constant 0 : index
    %319 = vector.load %arg8[%c0_82, %c0_83] : memref<1x2xf32, #tpu.memory_space<vmem>>, vector<1x2xf32>
    %320 = vector.broadcast %319 : vector<1x2xf32> to vector<16x2xf32>
    %321 = arith.addf %318, %320 : vector<16x2xf32>
    %322 = vector.extract_strided_slice %321 {offsets = [0, 0], sizes = [16, 1], strides = [1, 1]} : vector<16x2xf32> to vector<16x1xf32>
    %323 = vector.extract_strided_slice %321 {offsets = [0, 1], sizes = [16, 1], strides = [1, 1]} : vector<16x2xf32> to vector<16x1xf32>
    %324 = arith.maximumf %322, %323 : vector<16x1xf32>
    %325 = arith.subf %322, %324 : vector<16x1xf32>
    %326 = math.exp %325 : vector<16x1xf32>
    %327 = arith.subf %323, %324 : vector<16x1xf32>
    %328 = math.exp %327 : vector<16x1xf32>
    %329 = arith.addf %326, %328 : vector<16x1xf32>
    %330 = arith.divf %326, %329 : vector<16x1xf32>
    %331 = arith.divf %328, %329 : vector<16x1xf32>
    %c0_84 = arith.constant 0 : index
    %c0_85 = arith.constant 0 : index
    %332 = vector.load %arg4[%c0_84, %c0_85] : memref<16x1xf32, #tpu.memory_space<vmem>>, vector<16x1xf32>
    %cst_86 = arith.constant 5.000000e-01 : f32
    %333 = vector.broadcast %cst_86 : f32 to vector<16x1xf32>
    %334 = arith.cmpf ogt, %332, %333 : vector<16x1xf32>
    %cst_87 = arith.constant 1.000000e+00 : f32
    %335 = vector.broadcast %cst_87 : f32 to vector<16x1xf32>
    %336 = arith.select %334, %335, %330 : vector<16x1xi1>, vector<16x1xf32>
    %cst_88 = arith.constant 1.000000e+00 : f32
    %337 = vector.broadcast %cst_88 : f32 to vector<16x1xf32>
    %338 = arith.select %334, %337, %331 : vector<16x1xi1>, vector<16x1xf32>
    %339 = arith.maximumf %336, %338 : vector<16x1xf32>
    %340 = arith.cmpf ogt, %338, %336 : vector<16x1xf32>
    %341 = arith.extui %340 : vector<16x1xi1> to vector<16x1xi32>
    %342 = arith.sitofp %341 : vector<16x1xi32> to vector<16x1xf32>
    %cst_89 = arith.constant 9.99999968E-21 : f32
    %343 = vector.broadcast %cst_89 : f32 to vector<16x1xf32>
    %344 = arith.addf %339, %343 : vector<16x1xf32>
    %345 = math.log %344 : vector<16x1xf32>
    %346 = tpu.concatenate %339, %342, %345 in 1 : vector<16x1xf32>, vector<16x1xf32>, vector<16x1xf32> -> vector<16x3xf32>
    %c0_90 = arith.constant 0 : index
    %c0_91 = arith.constant 0 : index
    %347 = vector.load %arg10[%c0_90, %c0_91] : memref<16x3xf32, #tpu.memory_space<vmem>>, vector<16x3xf32>
    tpu.vector_store %arg10[%c0_90, %c0_91], %346 {strides = array<i32>} : memref<16x3xf32, #tpu.memory_space<vmem>>, vector<16x3xf32>,
    return
  }
  func.func @transform_0(%arg0: i32) -> (i32, i32) {
    %c0_i32 = arith.constant 0 : i32
    %c0_i32_0 = arith.constant 0 : i32
    %c0_i32_1 = arith.constant 0 : i32
    return %c0_i32, %c0_i32_0 : i32, i32
  }
  func.func @transform_1(%arg0: i32) -> (i32, i32) {
    %c0_i32 = arith.constant 0 : i32
    %c0_i32_0 = arith.constant 0 : i32
    %c0_i32_1 = arith.constant 0 : i32
    return %c0_i32, %c0_i32_0 : i32, i32
  }
  func.func @transform_2(%arg0: i32) -> (i32, i32) {
    %c0_i32 = arith.constant 0 : i32
    %c0_i32_0 = arith.constant 0 : i32
    %c0_i32_1 = arith.constant 0 : i32
    return %c0_i32, %c0_i32_0 : i32, i32
  }
  func.func @transform_3(%arg0: i32) -> (i32, i32) {
    %c0_i32 = arith.constant 0 : i32
    %c0_i32_0 = arith.constant 0 : i32
    %c0_i32_1 = arith.constant 0 : i32
    return %c0_i32, %c0_i32_0 : i32, i32
  }
  func.func @transform_4(%arg0: i32) -> (i32, i32) {
    %c0_i32 = arith.constant 0 : i32
    %c0_i32_0 = arith.constant 0 : i32
    %c0_i32_1 = arith.constant 0 : i32
    return %c0_i32, %c0_i32_0 : i32, i32
  }
  func.func @transform_5(%arg0: i32) -> (i32, i32) {
    %c0_i32 = arith.constant 0 : i32
    %c0_i32_0 = arith.constant 0 : i32
    %c0_i32_1 = arith.constant 0 : i32
    return %c0_i32, %c0_i32_0 : i32, i32
  }
  func.func @transform_6(%arg0: i32) -> (i32, i32) {
    %c0_i32 = arith.constant 0 : i32
    %c0_i32_0 = arith.constant 0 : i32
    %c0_i32_1 = arith.constant 0 : i32
    return %c0_i32, %c0_i32_0 : i32, i32
  }
  func.func @transform_7(%arg0: i32) -> (i32, i32) {
    %c0_i32 = arith.constant 0 : i32
    %c0_i32_0 = arith.constant 0 : i32
    %c0_i32_1 = arith.constant 0 : i32
    return %c0_i32, %c0_i32_0 : i32, i32
  }
  func.func @transform_8(%arg0: i32) -> (i32, i32) {
    %c0_i32 = arith.constant 0 : i32
    %c0_i32_0 = arith.constant 0 : i32
    %c0_i32_1 = arith.constant 0 : i32
    return %c0_i32, %c0_i32_0 : i32, i32
  }
  func.func @transform_9(%arg0: i32) -> (i32, i32) {
    %c0_i32 = arith.constant 0 : i32
    %c0_i32_0 = arith.constant 0 : i32
    %c0_i32_1 = arith.constant 0 : i32
    return %c0_i32, %c0_i32_0 : i32, i32
  }
}

</mosaic_0001>

<llo_original>
// kernel: extract_forward.1
$region0: #{extract_forward.1}
  #allocation0 [shape = 'u32[]', space=smem, size = 0x4, offset = 0x4, fixed_abs, tag = 'smem constant byte address 0x4 - core index']
  #allocation1 [shape = 'u32[144,128]{1,0:T(1,128)}', space=vmem, size = 0x12000, scoped, tag = 'internal scratch']
  %s0 = inlined_call_operand.vmem [shape: f32[16,256], index: 0, kind: input, shape index: {}]
  %s1 = inlined_call_operand.vmem [shape: f32[16,64], index: 1, kind: input, shape index: {}]
  %s2 = inlined_call_operand.vmem [shape: bf16[64,256], index: 2, kind: input, shape index: {}]
  %s3 = inlined_call_operand.vmem [shape: f32[16,1], index: 3, kind: input, shape index: {}]
  %s4 = inlined_call_operand.vmem [shape: f32[64,32], index: 4, kind: input, shape index: {}]
  %s5 = inlined_call_operand.vmem [shape: f32[1,32], index: 5, kind: input, shape index: {}]
  %s6 = inlined_call_operand.vmem [shape: f32[32,2], index: 6, kind: input, shape index: {}]
  %s7 = inlined_call_operand.vmem [shape: f32[1,2], index: 7, kind: input, shape index: {}]
  %s8 = inlined_call_operand.vmem [shape: f32[16,64], index: 8, kind: output, shape index: {0}]
  %s9 = inlined_call_operand.vmem [shape: f32[16,3], index: 9, kind: output, shape index: {1}]
  %10 = xla_tuple %s8, %s9
  %s11 = sld [smem:[#allocation0]]
  $region50: #{extract_forward.1} parent=0
    _
  %s13 = ssub.s32 1, %s11
  %s14 = scalar_select 0, %s13, %s11
  // Predicated region
  $region2: #{extract_forward.1} parent=0 // pred_check
    _
  $region3: #{extract_forward.1} parent=0 // pred_check_branch
    %16 = sbr.rel (0) target = $region5
  $region4: #{extract_forward.1} parent=0 // pred_region
    _
  $region5: #{extract_forward.1} parent=0 // pred_fallthru
    _
  // Predicated region
  $region6: #{extract_forward.1} parent=0 // pred_check
    _
  $region7: #{extract_forward.1} parent=0 // pred_check_branch
    %18 = sbr.rel (0) target = $region9
  $region8: #{extract_forward.1} parent=0 // pred_region
    _
  $region9: #{extract_forward.1} parent=0 // pred_fallthru
    _
  // Predicated region
  $region10: #{extract_forward.1} parent=0 // pred_check
    _
  $region11: #{extract_forward.1} parent=0 // pred_check_branch
    %20 = sbr.rel (0) target = $region13
  $region12: #{extract_forward.1} parent=0 // pred_region
    _
  $region13: #{extract_forward.1} parent=0 // pred_fallthru
    _
  // Predicated region
  $region14: #{extract_forward.1} parent=0 // pred_check
    _
  $region15: #{extract_forward.1} parent=0 // pred_check_branch
    %22 = sbr.rel (0) target = $region17
  $region16: #{extract_forward.1} parent=0 // pred_region
    _
  $region17: #{extract_forward.1} parent=0 // pred_fallthru
    _
  // Predicated region
  $region18: #{extract_forward.1} parent=0 // pred_check
    _
  $region19: #{extract_forward.1} parent=0 // pred_check_branch
    %24 = sbr.rel (0) target = $region21
  $region20: #{extract_forward.1} parent=0 // pred_region
    _
  $region21: #{extract_forward.1} parent=0 // pred_fallthru
    _
  // Predicated region
  $region22: #{extract_forward.1} parent=0 // pred_check
    _
  $region23: #{extract_forward.1} parent=0 // pred_check_branch
    %26 = sbr.rel (0) target = $region25
  $region24: #{extract_forward.1} parent=0 // pred_region
    _
  $region25: #{extract_forward.1} parent=0 // pred_fallthru
    _
  // Predicated region
  $region26: #{extract_forward.1} parent=0 // pred_check
    _
  $region27: #{extract_forward.1} parent=0 // pred_check_branch
    %28 = sbr.rel (0) target = $region29
  $region28: #{extract_forward.1} parent=0 // pred_region
    _
  $region29: #{extract_forward.1} parent=0 // pred_fallthru
    _
  // Predicated region
  $region30: #{extract_forward.1} parent=0 // pred_check
    _
  $region31: #{extract_forward.1} parent=0 // pred_check_branch
    %30 = sbr.rel (0) target = $region33
  $region32: #{extract_forward.1} parent=0 // pred_region
    _
  $region33: #{extract_forward.1} parent=0 // pred_fallthru
    _
  %v32 = vld [vmem:[%s0] sm:$0xff]
  %v33 = vld [vmem:[%s0 + $0x8] sm:$0xff]
  %v34 = vld [vmem:[%s0 + $0x10] sm:$0xff]
  %v35 = vld [vmem:[%s0 + $0x18] sm:$0xff]
  %v36 = vld [vmem:[%s2] sm:$0xff]
  %v37 = vld [vmem:[%s2 + $0x8] sm:$0xff]
  %v38 = vld [vmem:[%s2 + $0x10] sm:$0xff]
  %v39 = vld [vmem:[%s2 + $0x18] sm:$0xff]
  %v40 = vld [vmem:[%s2 + $0x20] sm:$0xff]
  %v41 = vld [vmem:[%s2 + $0x28] sm:$0xff]
  %v42 = vld [vmem:[%s2 + $0x30] sm:$0xff]
  %v43 = vld [vmem:[%s2 + $0x38] sm:$0xff]
  %v44 = vld [vmem:[%s1] sm:$0xff]
  %v45 = vld [vmem:[%s1 + $0x8] sm:$0xff]
  %vm46 = vcmp.gt.f32.partialorder %v44, 0.5
  %vm47 = vcmp.gt.f32.partialorder %v45, 0.5
  %v56 = vunpack.c.l.b16 %v36
  %v57 = vunpack.c.h.b16 %v36
  %v58 = vunpack.c.l.b16 %v37
  %v59 = vunpack.c.h.b16 %v37
  %v60 = vunpack.c.l.b16 %v38
  %v61 = vunpack.c.h.b16 %v38
  %v62 = vunpack.c.l.b16 %v39
  %v63 = vunpack.c.h.b16 %v39
  %v64 = vunpack.c.l.b16 %v40
  %v65 = vunpack.c.h.b16 %v40
  %v66 = vunpack.c.l.b16 %v41
  %v67 = vunpack.c.h.b16 %v41
  %v68 = vunpack.c.l.b16 %v42
  %v69 = vunpack.c.h.b16 %v42
  %v70 = vunpack.c.l.b16 %v43
  %v71 = vunpack.c.h.b16 %v43
  %v72 = vpack.c.b16 %v58, %v56
  %v73 = vpack.c.b16 %v59, %v57
  %v74 = vpack.c.b16 %v62, %v60
  %v75 = vpack.c.b16 %v63, %v61
  %v76 = vpack.c.b16 %v66, %v64
  %v77 = vpack.c.b16 %v67, %v65
  %v78 = vpack.c.b16 %v70, %v68
  %v79 = vpack.c.b16 %v71, %v69
  %vm88 = vcmask 523264
  %v90 = vsel %vm88, 0, 0
  %92 = vmatprep.subr.bf16.mxu0 %v73
  %93 = vmatpush1.bf16.msra.mxu0 %v72
  %94 = vmatprep.subr.bf16.mxu0 %v75
  %95 = vmatpush1.bf16.msra.mxu0 %v74
  %96 = vmatprep.subr.bf16.mxu0 %v77
  %97 = vmatpush1.bf16.msra.mxu0 %v76
  %98 = vmatprep.subr.bf16.mxu0 %v79
  %99 = vmatpush1.bf16.msra.mxu0 %v78
  %100 = vmatprep.subr.bf16.mxu0 0
  %101 = vmatpush1.bf16.msra.mxu0 0
  %102 = vmatprep.subr.bf16.mxu0 0
  %103 = vmatpush1.bf16.msra.mxu0 0
  %104 = vmatprep.subr.bf16.mxu0 0
  %105 = vmatpush1.bf16.msra.mxu0 0
  %106 = vmatprep.subr.bf16.mxu0 0
  %107 = vmatpush1.bf16.msra.mxu0 0
  %108 = vmatprep.subr.bf16.mxu0 0
  %109 = vmatpush1.bf16.msra.mxu0 0
  %110 = vmatprep.subr.bf16.mxu0 0
  %111 = vmatpush1.bf16.msra.mxu0 0
  %112 = vmatprep.subr.bf16.mxu0 0
  %113 = vmatpush1.bf16.msra.mxu0 0
  %114 = vmatprep.subr.bf16.mxu0 0
  %115 = vmatpush1.bf16.msra.mxu0 0
  %116 = vmatprep.subr.bf16.mxu0 0
  %117 = vmatpush1.bf16.msra.mxu0 0
  %118 = vmatprep.subr.bf16.mxu0 0
  %119 = vmatpush1.bf16.msra.mxu0 0
  %120 = vmatprep.subr.bf16.mxu0 0
  %121 = vmatpush1.bf16.msra.mxu0 0
  %122 = vmatprep.subr.bf16.mxu0 0
  %123 = vmatpush1.bf16.msra.mxu0 0
  %124 = vmatprep.mubr.bf16.mxu0 0
  %125 = vmatmul.mubr.bf16.gmra.mrb[0].mxu0 %v90
  %v126 = vpop.f32.mrb[0].mxu0
  %v127 = vadd.f32 0.0, %v126
  %v128 = vpop.f32.mrb[0].mxu0
  %v129 = vadd.f32 0.0, %v128
  %v130 = vpop.f32.mrb[0].mxu0
  %v131 = vpop.f32.mrb[0].mxu0
  %132 = vdwg.mxu0
  %v133 = vadd.f32 %v32, %v127
  %v134 = vadd.f32 %v33, %v129
  %v135 = vxor.u32 %v133, 2147483648
  %v136 = vmul.f32 %v135, 1.442695
  %v137 = vpow.pop %v136
  %v138 = vadd.f32 %v137, 1.0
  %v139 = vrcp.pop %v138
  %v140 = vmul.f32 1.0, %v139
  %v141 = vtanh.pop %v134
  %v142 = vxor.u32 %v134, 2147483648
  %v143 = vmul.f32 %v142, 1.442695
  %v144 = vpow.pop %v143
  %v145 = vadd.f32 %v144, 1.0
  %v146 = vrcp.pop %v145
  %v147 = vmul.f32 1.0, %v146
  %v148 = vmul.f32 %v140, 0.0
  %v149 = vmul.f32 %v140, %v141
  %151 = vrot.lane.b32.xlu0 %v149, 64
  %v152 = vpop.permute.xlu0 %151
  %v154 = vadd.f32 %v148, %v152
  %v155 = vtanh.pop %v154
  %v156 = vmul.f32 %v147, %v155
  %158 = vrot.lane.b32.xlu0 %v154, 64
  %v159 = vpop.permute.xlu0 %158
  %v161 = vsel %vm46, %v159, 0.0
  %163 = vrot.lane.b32.xlu0 %v156, 64
  %v164 = vpop.permute.xlu0 %163
  %v166 = vsel %vm46, %v164, 0.0
  %vm167 = vcmask 254976
  %168 = vst.msk [vmem:[%s8] sm:$0x3] %vm167, %v166
  %vm169 = vcmask 517376
  %170 = vst.msk [vmem:[%s8 + $0xe] sm:$0x3] %vm169, %v166
  %v171 = vpack.c.bf16 %v166, %v166
  %v173 = vsel %vm88, %v171, 0
  %175 = vmatprep.subr.bf16.mxu0 %v73
  %176 = vmatpush1.bf16.msra.mxu0 %v72
  %177 = vmatprep.subr.bf16.mxu0 %v75
  %178 = vmatpush1.bf16.msra.mxu0 %v74
  %179 = vmatprep.subr.bf16.mxu0 %v77
  %180 = vmatpush1.bf16.msra.mxu0 %v76
  %181 = vmatprep.subr.bf16.mxu0 %v79
  %182 = vmatpush1.bf16.msra.mxu0 %v78
  %183 = vmatprep.subr.bf16.mxu0 0
  %184 = vmatpush1.bf16.msra.mxu0 0
  %185 = vmatprep.subr.bf16.mxu0 0
  %186 = vmatpush1.bf16.msra.mxu0 0
  %187 = vmatprep.subr.bf16.mxu0 0
  %188 = vmatpush1.bf16.msra.mxu0 0
  %189 = vmatprep.subr.bf16.mxu0 0
  %190 = vmatpush1.bf16.msra.mxu0 0
  %191 = vmatprep.subr.bf16.mxu0 0
  %192 = vmatpush1.bf16.msra.mxu0 0
  %193 = vmatprep.subr.bf16.mxu0 0
  %194 = vmatpush1.bf16.msra.mxu0 0
  %195 = vmatprep.subr.bf16.mxu0 0
  %196 = vmatpush1.bf16.msra.mxu0 0
  %197 = vmatprep.subr.bf16.mxu0 0
  %198 = vmatpush1.bf16.msra.mxu0 0
  %199 = vmatprep.subr.bf16.mxu0 0
  %200 = vmatpush1.bf16.msra.mxu0 0
  %201 = vmatprep.subr.bf16.mxu0 0
  %202 = vmatpush1.bf16.msra.mxu0 0
  %203 = vmatprep.subr.bf16.mxu0 0
  %204 = vmatpush1.bf16.msra.mxu0 0
  %205 = vmatprep.subr.bf16.mxu0 0
  %206 = vmatpush1.bf16.msra.mxu0 0
  %207 = vmatprep.mubr.bf16.mxu0 0
  %208 = vmatmul.mubr.bf16.gmra.mrb[0].mxu0 %v173
  %v209 = vpop.f32.mrb[0].mxu0
  %v210 = vadd.f32 0.0, %v209
  %v211 = vpop.f32.mrb[0].mxu0
  %v212 = vadd.f32 0.0, %v211
  %v213 = vpop.f32.mrb[0].mxu0
  %v214 = vpop.f32.mrb[0].mxu0
  %215 = vdwg.mxu0
  %v218 = vrot.slane %v210, 6
  %v219 = vrot.slane %v212, 6
  %v222 = vadd.f32 %v32, %v218
  %v223 = vadd.f32 %v33, %v219
  %v224 = vxor.u32 %v222, 2147483648
  %v225 = vmul.f32 %v224, 1.442695
  %v226 = vpow.pop %v225
  %v227 = vadd.f32 %v226, 1.0
  %v228 = vrcp.pop %v227
  %v229 = vmul.f32 1.0, %v228
  %v230 = vtanh.pop %v223
  %v231 = vxor.u32 %v223, 2147483648
  %v232 = vmul.f32 %v231, 1.442695
  %v233 = vpow.pop %v232
  %v234 = vadd.f32 %v233, 1.0
  %v235 = vrcp.pop %v234
  %v236 = vmul.f32 1.0, %v235
  %v238 = vrot.slane %v161, 6
  %239 = vrot.lane.b32.xlu0 %v238, 64
  %v240 = vpop.permute.xlu0 %239
  %v242 = vmul.f32 %v229, %v240
  %v243 = vmul.f32 %v229, %v230
  %245 = vrot.lane.b32.xlu0 %v243, 64
  %v246 = vpop.permute.xlu0 %245
  %v248 = vadd.f32 %v242, %v246
  %v249 = vtanh.pop %v248
  %v250 = vmul.f32 %v236, %v249
  %252 = vrot.lane.b32.xlu0 %v248, 64
  %v253 = vpop.permute.xlu0 %252
  %v256 = vsel %vm46, %v253, %v238
  %258 = vrot.lane.b32.xlu0 %v250, 64
  %v259 = vpop.permute.xlu0 %258
  %v262 = vrot.slane %v166, 6
  %v264 = vsel %vm46, %v259, %v262
  %v265 = vsel %vm46, %v259, 0.0
  %vm266 = vcmask 257026
  %267 = vst.msk [vmem:[%s8] sm:$0xc] %vm266, %v265
  %vm268 = vcmask 519426
  %269 = vst.msk [vmem:[%s8 + $0xa] sm:$0xc] %vm268, %v265
  %v270 = vpack.c.bf16 %v264, %v264
  %v272 = vrot.slane %v270, 1
  %v274 = vsel %vm88, %v272, 0
  %276 = vmatprep.subr.bf16.mxu0 %v73
  %277 = vmatpush1.bf16.msra.mxu0 %v72
  %278 = vmatprep.subr.bf16.mxu0 %v75
  %279 = vmatpush1.bf16.msra.mxu0 %v74
  %280 = vmatprep.subr.bf16.mxu0 %v77
  %281 = vmatpush1.bf16.msra.mxu0 %v76
  %282 = vmatprep.subr.bf16.mxu0 %v79
  %283 = vmatpush1.bf16.msra.mxu0 %v78
  %284 = vmatprep.subr.bf16.mxu0 0
  %285 = vmatpush1.bf16.msra.mxu0 0
  %286 = vmatprep.subr.bf16.mxu0 0
  %287 = vmatpush1.bf16.msra.mxu0 0
  %288 = vmatprep.subr.bf16.mxu0 0
  %289 = vmatpush1.bf16.msra.mxu0 0
  %290 = vmatprep.subr.bf16.mxu0 0
  %291 = vmatpush1.bf16.msra.mxu0 0
  %292 = vmatprep.subr.bf16.mxu0 0
  %293 = vmatpush1.bf16.msra.mxu0 0
  %294 = vmatprep.subr.bf16.mxu0 0
  %295 = vmatpush1.bf16.msra.mxu0 0
  %296 = vmatprep.subr.bf16.mxu0 0
  %297 = vmatpush1.bf16.msra.mxu0 0
  %298 = vmatprep.subr.bf16.mxu0 0
  %299 = vmatpush1.bf16.msra.mxu0 0
  %300 = vmatprep.subr.bf16.mxu0 0
  %301 = vmatpush1.bf16.msra.mxu0 0
  %302 = vmatprep.subr.bf16.mxu0 0
  %303 = vmatpush1.bf16.msra.mxu0 0
  %304 = vmatprep.subr.bf16.mxu0 0
  %305 = vmatpush1.bf16.msra.mxu0 0
  %306 = vmatprep.subr.bf16.mxu0 0
  %307 = vmatpush1.bf16.msra.mxu0 0
  %308 = vmatprep.mubr.bf16.mxu0 0
  %309 = vmatmul.mubr.bf16.gmra.mrb[0].mxu0 %v274
  %v310 = vpop.f32.mrb[0].mxu0
  %v311 = vadd.f32 0.0, %v310
  %v312 = vpop.f32.mrb[0].mxu0
  %v313 = vadd.f32 0.0, %v312
  %v314 = vpop.f32.mrb[0].mxu0
  %v315 = vpop.f32.mrb[0].mxu0
  %316 = vdwg.mxu0
  %v319 = vrot.slane %v311, 4
  %v320 = vrot.slane %v313, 4
  %v323 = vadd.f32 %v32, %v319
  %v324 = vadd.f32 %v33, %v320
  %v325 = vxor.u32 %v323, 2147483648
  %v326 = vmul.f32 %v325, 1.442695
  %v327 = vpow.pop %v326
  %v328 = vadd.f32 %v327, 1.0
  %v329 = vrcp.pop %v328
  %v330 = vmul.f32 1.0, %v329
  %v331 = vtanh.pop %v324
  %v332 = vxor.u32 %v324, 2147483648
  %v333 = vmul.f32 %v332, 1.442695
  %v334 = vpow.pop %v333
  %v335 = vadd.f32 %v334, 1.0
  %v336 = vrcp.pop %v335
  %v337 = vmul.f32 1.0, %v336
  %v339 = vrot.slane %v256, 6
  %340 = vrot.lane.b32.xlu0 %v339, 64
  %v341 = vpop.permute.xlu0 %340
  %v343 = vmul.f32 %v330, %v341
  %v344 = vmul.f32 %v330, %v331
  %346 = vrot.lane.b32.xlu0 %v344, 64
  %v347 = vpop.permute.xlu0 %346
  %v349 = vadd.f32 %v343, %v347
  %v350 = vtanh.pop %v349
  %v351 = vmul.f32 %v337, %v350
  %353 = vrot.lane.b32.xlu0 %v349, 64
  %v354 = vpop.permute.xlu0 %353
  %v357 = vsel %vm46, %v354, %v339
  %359 = vrot.lane.b32.xlu0 %v351, 64
  %v360 = vpop.permute.xlu0 %359
  %v363 = vrot.slane %v264, 6
  %v365 = vsel %vm46, %v360, %v363
  %v366 = vsel %vm46, %v360, 0.0
  %vm367 = vcmask 259076
  %368 = vst.msk [vmem:[%s8] sm:$0x30] %vm367, %v366
  %vm369 = vcmask 521476
  %370 = vst.msk [vmem:[%s8 + $0x6] sm:$0x30] %vm369, %v366
  %v371 = vpack.c.bf16 %v365, %v365
  %v373 = vrot.slane %v371, 2
  %v375 = vsel %vm88, %v373, 0
  %377 = vmatprep.subr.bf16.mxu0 %v73
  %378 = vmatpush1.bf16.msra.mxu0 %v72
  %379 = vmatprep.subr.bf16.mxu0 %v75
  %380 = vmatpush1.bf16.msra.mxu0 %v74
  %381 = vmatprep.subr.bf16.mxu0 %v77
  %382 = vmatpush1.bf16.msra.mxu0 %v76
  %383 = vmatprep.subr.bf16.mxu0 %v79
  %384 = vmatpush1.bf16.msra.mxu0 %v78
  %385 = vmatprep.subr.bf16.mxu0 0
  %386 = vmatpush1.bf16.msra.mxu0 0
  %387 = vmatprep.subr.bf16.mxu0 0
  %388 = vmatpush1.bf16.msra.mxu0 0
  %389 = vmatprep.subr.bf16.mxu0 0
  %390 = vmatpush1.bf16.msra.mxu0 0
  %391 = vmatprep.subr.bf16.mxu0 0
  %392 = vmatpush1.bf16.msra.mxu0 0
  %393 = vmatprep.subr.bf16.mxu0 0
  %394 = vmatpush1.bf16.msra.mxu0 0
  %395 = vmatprep.subr.bf16.mxu0 0
  %396 = vmatpush1.bf16.msra.mxu0 0
  %397 = vmatprep.subr.bf16.mxu0 0
  %398 = vmatpush1.bf16.msra.mxu0 0
  %399 = vmatprep.subr.bf16.mxu0 0
  %400 = vmatpush1.bf16.msra.mxu0 0
  %401 = vmatprep.subr.bf16.mxu0 0
  %402 = vmatpush1.bf16.msra.mxu0 0
  %403 = vmatprep.subr.bf16.mxu0 0
  %404 = vmatpush1.bf16.msra.mxu0 0
  %405 = vmatprep.subr.bf16.mxu0 0
  %406 = vmatpush1.bf16.msra.mxu0 0
  %407 = vmatprep.subr.bf16.mxu0 0
  %408 = vmatpush1.bf16.msra.mxu0 0
  %409 = vmatprep.mubr.bf16.mxu0 0
  %410 = vmatmul.mubr.bf16.gmra.mrb[0].mxu0 %v375
  %v411 = vpop.f32.mrb[0].mxu0
  %v412 = vadd.f32 0.0, %v411
  %v413 = vpop.f32.mrb[0].mxu0
  %v414 = vadd.f32 0.0, %v413
  %v415 = vpop.f32.mrb[0].mxu0
  %v416 = vpop.f32.mrb[0].mxu0
  %417 = vdwg.mxu0
  %v420 = vrot.slane %v412, 2
  %v421 = vrot.slane %v414, 2
  %v424 = vadd.f32 %v32, %v420
  %v425 = vadd.f32 %v33, %v421
  %v426 = vxor.u32 %v424, 2147483648
  %v427 = vmul.f32 %v426, 1.442695
  %v428 = vpow.pop %v427
  %v429 = vadd.f32 %v428, 1.0
  %v430 = vrcp.pop %v429
  %v431 = vmul.f32 1.0, %v430
  %v432 = vtanh.pop %v425
  %v433 = vxor.u32 %v425, 2147483648
  %v434 = vmul.f32 %v433, 1.442695
  %v435 = vpow.pop %v434
  %v436 = vadd.f32 %v435, 1.0
  %v437 = vrcp.pop %v436
  %v438 = vmul.f32 1.0, %v437
  %v440 = vrot.slane %v357, 6
  %441 = vrot.lane.b32.xlu0 %v440, 64
  %v442 = vpop.permute.xlu0 %441
  %v444 = vmul.f32 %v431, %v442
  %v445 = vmul.f32 %v431, %v432
  %447 = vrot.lane.b32.xlu0 %v445, 64
  %v448 = vpop.permute.xlu0 %447
  %v450 = vadd.f32 %v444, %v448
  %v451 = vtanh.pop %v450
  %v452 = vmul.f32 %v438, %v451
  %454 = vrot.lane.b32.xlu0 %v450, 64
  %v455 = vpop.permute.xlu0 %454
  %v458 = vsel %vm46, %v455, %v440
  %460 = vrot.lane.b32.xlu0 %v452, 64
  %v461 = vpop.permute.xlu0 %460
  %v464 = vrot.slane %v365, 6
  %v466 = vsel %vm46, %v461, %v464
  %v467 = vsel %vm46, %v461, 0.0
  %vm468 = vcmask 261126
  %469 = vst.msk [vmem:[%s8] sm:$0xc0] %vm468, %v467
  %vm470 = vcmask 523526
  %471 = vst.msk [vmem:[%s8 + $0x2] sm:$0xc0] %vm470, %v467
  %v472 = vpack.c.bf16 %v466, %v466
  %v474 = vrot.slane %v472, 3
  %v476 = vsel %vm88, %v474, 0
  %478 = vmatprep.subr.bf16.mxu0 %v73
  %479 = vmatpush1.bf16.msra.mxu0 %v72
  %480 = vmatprep.subr.bf16.mxu0 %v75
  %481 = vmatpush1.bf16.msra.mxu0 %v74
  %482 = vmatprep.subr.bf16.mxu0 %v77
  %483 = vmatpush1.bf16.msra.mxu0 %v76
  %484 = vmatprep.subr.bf16.mxu0 %v79
  %485 = vmatpush1.bf16.msra.mxu0 %v78
  %486 = vmatprep.subr.bf16.mxu0 0
  %487 = vmatpush1.bf16.msra.mxu0 0
  %488 = vmatprep.subr.bf16.mxu0 0
  %489 = vmatpush1.bf16.msra.mxu0 0
  %490 = vmatprep.subr.bf16.mxu0 0
  %491 = vmatpush1.bf16.msra.mxu0 0
  %492 = vmatprep.subr.bf16.mxu0 0
  %493 = vmatpush1.bf16.msra.mxu0 0
  %494 = vmatprep.subr.bf16.mxu0 0
  %495 = vmatpush1.bf16.msra.mxu0 0
  %496 = vmatprep.subr.bf16.mxu0 0
  %497 = vmatpush1.bf16.msra.mxu0 0
  %498 = vmatprep.subr.bf16.mxu0 0
  %499 = vmatpush1.bf16.msra.mxu0 0
  %500 = vmatprep.subr.bf16.mxu0 0
  %501 = vmatpush1.bf16.msra.mxu0 0
  %502 = vmatprep.subr.bf16.mxu0 0
  %503 = vmatpush1.bf16.msra.mxu0 0
  %504 = vmatprep.subr.bf16.mxu0 0
  %505 = vmatpush1.bf16.msra.mxu0 0
  %506 = vmatprep.subr.bf16.mxu0 0
  %507 = vmatpush1.bf16.msra.mxu0 0
  %508 = vmatprep.subr.bf16.mxu0 0
  %509 = vmatpush1.bf16.msra.mxu0 0
  %510 = vmatprep.mubr.bf16.mxu0 0
  %511 = vmatmul.mubr.bf16.gmra.mrb[0].mxu0 %v476
  %v512 = vpop.f32.mrb[0].mxu0
  %v513 = vadd.f32 0.0, %v512
  %v514 = vpop.f32.mrb[0].mxu0
  %v515 = vadd.f32 0.0, %v514
  %v516 = vpop.f32.mrb[0].mxu0
  %v517 = vpop.f32.mrb[0].mxu0
  %518 = vdwg.mxu0
  %v519 = vadd.f32 %v34, %v513
  %v520 = vadd.f32 %v35, %v515
  %v521 = vxor.u32 %v519, 2147483648
  %v522 = vmul.f32 %v521, 1.442695
  %v523 = vpow.pop %v522
  %v524 = vadd.f32 %v523, 1.0
  %v525 = vrcp.pop %v524
  %v526 = vmul.f32 1.0, %v525
  %v527 = vtanh.pop %v520
  %v528 = vxor.u32 %v520, 2147483648
  %v529 = vmul.f32 %v528, 1.442695
  %v530 = vpow.pop %v529
  %v531 = vadd.f32 %v530, 1.0
  %v532 = vrcp.pop %v531
  %v533 = vmul.f32 1.0, %v532
  %v535 = vrot.slane %v458, 6
  %536 = vrot.lane.b32.xlu0 %v535, 64
  %v537 = vpop.permute.xlu0 %536
  %v539 = vmul.f32 %v526, %v537
  %v540 = vmul.f32 %v526, %v527
  %542 = vrot.lane.b32.xlu0 %v540, 64
  %v543 = vpop.permute.xlu0 %542
  %v545 = vadd.f32 %v539, %v543
  %v546 = vtanh.pop %v545
  %v547 = vmul.f32 %v533, %v546
  %549 = vrot.lane.b32.xlu0 %v545, 64
  %v550 = vpop.permute.xlu0 %549
  %v553 = vsel %vm47, %v550, %v535
  %555 = vrot.lane.b32.xlu0 %v547, 64
  %v556 = vpop.permute.xlu0 %555
  %v559 = vrot.slane %v466, 6
  %v561 = vsel %vm47, %v556, %v559
  %v562 = vsel %vm47, %v556, 0.0
  %563 = vst.msk [vmem:[%s8 + $0x8] sm:$0x3] %vm167, %v562
  %564 = vst.msk [vmem:[%s8 + $0x6] sm:$0x3] %vm169, %v562
  %v565 = vpack.c.bf16 %v561, %v561
  %v567 = vsel %vm88, %v565, 0
  %569 = vmatprep.subr.bf16.mxu0 %v73
  %570 = vmatpush1.bf16.msra.mxu0 %v72
  %571 = vmatprep.subr.bf16.mxu0 %v75
  %572 = vmatpush1.bf16.msra.mxu0 %v74
  %573 = vmatprep.subr.bf16.mxu0 %v77
  %574 = vmatpush1.bf16.msra.mxu0 %v76
  %575 = vmatprep.subr.bf16.mxu0 %v79
  %576 = vmatpush1.bf16.msra.mxu0 %v78
  %577 = vmatprep.subr.bf16.mxu0 0
  %578 = vmatpush1.bf16.msra.mxu0 0
  %579 = vmatprep.subr.bf16.mxu0 0
  %580 = vmatpush1.bf16.msra.mxu0 0
  %581 = vmatprep.subr.bf16.mxu0 0
  %582 = vmatpush1.bf16.msra.mxu0 0
  %583 = vmatprep.subr.bf16.mxu0 0
  %584 = vmatpush1.bf16.msra.mxu0 0
  %585 = vmatprep.subr.bf16.mxu0 0
  %586 = vmatpush1.bf16.msra.mxu0 0
  %587 = vmatprep.subr.bf16.mxu0 0
  %588 = vmatpush1.bf16.msra.mxu0 0
  %589 = vmatprep.subr.bf16.mxu0 0
  %590 = vmatpush1.bf16.msra.mxu0 0
  %591 = vmatprep.subr.bf16.mxu0 0
  %592 = vmatpush1.bf16.msra.mxu0 0
  %593 = vmatprep.subr.bf16.mxu0 0
  %594 = vmatpush1.bf16.msra.mxu0 0
  %595 = vmatprep.subr.bf16.mxu0 0
  %596 = vmatpush1.bf16.msra.mxu0 0
  %597 = vmatprep.subr.bf16.mxu0 0
  %598 = vmatpush1.bf16.msra.mxu0 0
  %599 = vmatprep.subr.bf16.mxu0 0
  %600 = vmatpush1.bf16.msra.mxu0 0
  %601 = vmatprep.mubr.bf16.mxu0 0
  %602 = vmatmul.mubr.bf16.gmra.mrb[0].mxu0 %v567
  %v603 = vpop.f32.mrb[0].mxu0
  %v604 = vadd.f32 0.0, %v603
  %v605 = vpop.f32.mrb[0].mxu0
  %v606 = vadd.f32 0.0, %v605
  %v607 = vpop.f32.mrb[0].mxu0
  %v608 = vpop.f32.mrb[0].mxu0
  %609 = vdwg.mxu0
  %v612 = vrot.slane %v604, 6
  %v613 = vrot.slane %v606, 6
  %v616 = vadd.f32 %v34, %v612
  %v617 = vadd.f32 %v35, %v613
  %v618 = vxor.u32 %v616, 2147483648
  %v619 = vmul.f32 %v618, 1.442695
  %v620 = vpow.pop %v619
  %v621 = vadd.f32 %v620, 1.0
  %v622 = vrcp.pop %v621
  %v623 = vmul.f32 1.0, %v622
  %v624 = vtanh.pop %v617
  %v625 = vxor.u32 %v617, 2147483648
  %v626 = vmul.f32 %v625, 1.442695
  %v627 = vpow.pop %v626
  %v628 = vadd.f32 %v627, 1.0
  %v629 = vrcp.pop %v628
  %v630 = vmul.f32 1.0, %v629
  %v632 = vrot.slane %v553, 6
  %633 = vrot.lane.b32.xlu0 %v632, 64
  %v634 = vpop.permute.xlu0 %633
  %v636 = vmul.f32 %v623, %v634
  %v637 = vmul.f32 %v623, %v624
  %639 = vrot.lane.b32.xlu0 %v637, 64
  %v640 = vpop.permute.xlu0 %639
  %v642 = vadd.f32 %v636, %v640
  %v643 = vtanh.pop %v642
  %v644 = vmul.f32 %v630, %v643
  %646 = vrot.lane.b32.xlu0 %v642, 64
  %v647 = vpop.permute.xlu0 %646
  %v650 = vsel %vm47, %v647, %v632
  %652 = vrot.lane.b32.xlu0 %v644, 64
  %v653 = vpop.permute.xlu0 %652
  %v656 = vrot.slane %v561, 6
  %v658 = vsel %vm47, %v653, %v656
  %v659 = vsel %vm47, %v653, 0.0
  %660 = vst.msk [vmem:[%s8 + $0x8] sm:$0xc] %vm266, %v659
  %661 = vst.msk [vmem:[%s8 + $0x2] sm:$0xc] %vm268, %v659
  %v662 = vpack.c.bf16 %v658, %v658
  %v664 = vrot.slane %v662, 1
  %v666 = vsel %vm88, %v664, 0
  %668 = vmatprep.subr.bf16.mxu0 %v73
  %669 = vmatpush1.bf16.msra.mxu0 %v72
  %670 = vmatprep.subr.bf16.mxu0 %v75
  %671 = vmatpush1.bf16.msra.mxu0 %v74
  %672 = vmatprep.subr.bf16.mxu0 %v77
  %673 = vmatpush1.bf16.msra.mxu0 %v76
  %674 = vmatprep.subr.bf16.mxu0 %v79
  %675 = vmatpush1.bf16.msra.mxu0 %v78
  %676 = vmatprep.subr.bf16.mxu0 0
  %677 = vmatpush1.bf16.msra.mxu0 0
  %678 = vmatprep.subr.bf16.mxu0 0
  %679 = vmatpush1.bf16.msra.mxu0 0
  %680 = vmatprep.subr.bf16.mxu0 0
  %681 = vmatpush1.bf16.msra.mxu0 0
  %682 = vmatprep.subr.bf16.mxu0 0
  %683 = vmatpush1.bf16.msra.mxu0 0
  %684 = vmatprep.subr.bf16.mxu0 0
  %685 = vmatpush1.bf16.msra.mxu0 0
  %686 = vmatprep.subr.bf16.mxu0 0
  %687 = vmatpush1.bf16.msra.mxu0 0
  %688 = vmatprep.subr.bf16.mxu0 0
  %689 = vmatpush1.bf16.msra.mxu0 0
  %690 = vmatprep.subr.bf16.mxu0 0
  %691 = vmatpush1.bf16.msra.mxu0 0
  %692 = vmatprep.subr.bf16.mxu0 0
  %693 = vmatpush1.bf16.msra.mxu0 0
  %694 = vmatprep.subr.bf16.mxu0 0
  %695 = vmatpush1.bf16.msra.mxu0 0
  %696 = vmatprep.subr.bf16.mxu0 0
  %697 = vmatpush1.bf16.msra.mxu0 0
  %698 = vmatprep.subr.bf16.mxu0 0
  %699 = vmatpush1.bf16.msra.mxu0 0
  %700 = vmatprep.mubr.bf16.mxu0 0
  %701 = vmatmul.mubr.bf16.gmra.mrb[0].mxu0 %v666
  %v702 = vpop.f32.mrb[0].mxu0
  %v703 = vadd.f32 0.0, %v702
  %v704 = vpop.f32.mrb[0].mxu0
  %v705 = vadd.f32 0.0, %v704
  %v706 = vpop.f32.mrb[0].mxu0
  %v707 = vpop.f32.mrb[0].mxu0
  %708 = vdwg.mxu0
  %v711 = vrot.slane %v703, 4
  %v712 = vrot.slane %v705, 4
  %v715 = vadd.f32 %v34, %v711
  %v716 = vadd.f32 %v35, %v712
  %v717 = vxor.u32 %v715, 2147483648
  %v718 = vmul.f32 %v717, 1.442695
  %v719 = vpow.pop %v718
  %v720 = vadd.f32 %v719, 1.0
  %v721 = vrcp.pop %v720
  %v722 = vmul.f32 1.0, %v721
  %v723 = vtanh.pop %v716
  %v724 = vxor.u32 %v716, 2147483648
  %v725 = vmul.f32 %v724, 1.442695
  %v726 = vpow.pop %v725
  %v727 = vadd.f32 %v726, 1.0
  %v728 = vrcp.pop %v727
  %v729 = vmul.f32 1.0, %v728
  %v731 = vrot.slane %v650, 6
  %732 = vrot.lane.b32.xlu0 %v731, 64
  %v733 = vpop.permute.xlu0 %732
  %v735 = vmul.f32 %v722, %v733
  %v736 = vmul.f32 %v722, %v723
  %738 = vrot.lane.b32.xlu0 %v736, 64
  %v739 = vpop.permute.xlu0 %738
  %v741 = vadd.f32 %v735, %v739
  %v742 = vtanh.pop %v741
  %v743 = vmul.f32 %v729, %v742
  %745 = vrot.lane.b32.xlu0 %v741, 64
  %v746 = vpop.permute.xlu0 %745
  %v749 = vsel %vm47, %v746, %v731
  %751 = vrot.lane.b32.xlu0 %v743, 64
  %v752 = vpop.permute.xlu0 %751
  %v755 = vrot.slane %v658, 6
  %v757 = vsel %vm47, %v752, %v755
  %v758 = vsel %vm47, %v752, 0.0
  %759 = vst.msk [vmem:[%s8 + $0x8] sm:$0x30] %vm367, %v758
  %760 = vst.msk [vmem:[%s8 - $0x2] sm:$0x30] %vm369, %v758
  %v761 = vpack.c.bf16 %v757, %v757
  %v763 = vrot.slane %v761, 2
  %v765 = vsel %vm88, %v763, 0
  %767 = vmatprep.subr.bf16.mxu0 %v73
  %768 = vmatpush1.bf16.msra.mxu0 %v72
  %769 = vmatprep.subr.bf16.mxu0 %v75
  %770 = vmatpush1.bf16.msra.mxu0 %v74
  %771 = vmatprep.subr.bf16.mxu0 %v77
  %772 = vmatpush1.bf16.msra.mxu0 %v76
  %773 = vmatprep.subr.bf16.mxu0 %v79
  %774 = vmatpush1.bf16.msra.mxu0 %v78
  %775 = vmatprep.subr.bf16.mxu0 0
  %776 = vmatpush1.bf16.msra.mxu0 0
  %777 = vmatprep.subr.bf16.mxu0 0
  %778 = vmatpush1.bf16.msra.mxu0 0
  %779 = vmatprep.subr.bf16.mxu0 0
  %780 = vmatpush1.bf16.msra.mxu0 0
  %781 = vmatprep.subr.bf16.mxu0 0
  %782 = vmatpush1.bf16.msra.mxu0 0
  %783 = vmatprep.subr.bf16.mxu0 0
  %784 = vmatpush1.bf16.msra.mxu0 0
  %785 = vmatprep.subr.bf16.mxu0 0
  %786 = vmatpush1.bf16.msra.mxu0 0
  %787 = vmatprep.subr.bf16.mxu0 0
  %788 = vmatpush1.bf16.msra.mxu0 0
  %789 = vmatprep.subr.bf16.mxu0 0
  %790 = vmatpush1.bf16.msra.mxu0 0
  %791 = vmatprep.subr.bf16.mxu0 0
  %792 = vmatpush1.bf16.msra.mxu0 0
  %793 = vmatprep.subr.bf16.mxu0 0
  %794 = vmatpush1.bf16.msra.mxu0 0
  %795 = vmatprep.subr.bf16.mxu0 0
  %796 = vmatpush1.bf16.msra.mxu0 0
  %797 = vmatprep.subr.bf16.mxu0 0
  %798 = vmatpush1.bf16.msra.mxu0 0
  %799 = vmatprep.mubr.bf16.mxu0 0
  %800 = vmatmul.mubr.bf16.gmra.mrb[0].mxu0 %v765
  %v801 = vpop.f32.mrb[0].mxu0
  %v802 = vadd.f32 0.0, %v801
  %v803 = vpop.f32.mrb[0].mxu0
  %v804 = vadd.f32 0.0, %v803
  %v805 = vpop.f32.mrb[0].mxu0
  %v806 = vpop.f32.mrb[0].mxu0
  %807 = vdwg.mxu0
  %v810 = vrot.slane %v802, 2
  %v811 = vrot.slane %v804, 2
  %v814 = vadd.f32 %v34, %v810
  %v815 = vadd.f32 %v35, %v811
  %v816 = vxor.u32 %v814, 2147483648
  %v817 = vmul.f32 %v816, 1.442695
  %v818 = vpow.pop %v817
  %v819 = vadd.f32 %v818, 1.0
  %v820 = vrcp.pop %v819
  %v821 = vmul.f32 1.0, %v820
  %v822 = vtanh.pop %v815
  %v823 = vxor.u32 %v815, 2147483648
  %v824 = vmul.f32 %v823, 1.442695
  %v825 = vpow.pop %v824
  %v826 = vadd.f32 %v825, 1.0
  %v827 = vrcp.pop %v826
  %v828 = vmul.f32 1.0, %v827
  %v830 = vrot.slane %v749, 6
  %831 = vrot.lane.b32.xlu0 %v830, 64
  %v832 = vpop.permute.xlu0 %831
  %v834 = vmul.f32 %v821, %v832
  %v835 = vmul.f32 %v821, %v822
  %837 = vrot.lane.b32.xlu0 %v835, 64
  %v838 = vpop.permute.xlu0 %837
  %v840 = vadd.f32 %v834, %v838
  %v841 = vtanh.pop %v840
  %v842 = vmul.f32 %v828, %v841
  %844 = vrot.lane.b32.xlu0 %v842, 64
  %v845 = vpop.permute.xlu0 %844
  %v847 = vsel %vm47, %v845, 0.0
  %848 = vst.msk [vmem:[%s8 + $0x8] sm:$0xc0] %vm468, %v847
  %849 = vst.msk [vmem:[%s8 - $0x6] sm:$0xc0] %vm470, %v847
  %v850 = vld [vmem:[%s8] sm:$0xff]
  %v851 = vld [vmem:[%s8 + $0x8] sm:$0xff]
  %v852 = vld [vmem:[%s4] sm:$0xff]
  %v853 = vld [vmem:[%s4 + $0x8] sm:$0xff]
  %v854 = vld [vmem:[%s4 + $0x10] sm:$0xff]
  %v855 = vld [vmem:[%s4 + $0x18] sm:$0xff]
  %v856 = vld [vmem:[%s4 + $0x20] sm:$0xff]
  %v857 = vld [vmem:[%s4 + $0x28] sm:$0xff]
  %v858 = vld [vmem:[%s4 + $0x30] sm:$0xff]
  %v859 = vld [vmem:[%s4 + $0x38] sm:$0xff]
  %v860 = vld [vmem:[%s5] sm:$0x1]
  %v862 = vlaneseq
  %v863 = vshrl.u32 %v862, 7
  %v864 = vsub.s32 0, %v863
  %v865 = vrot.slane %v860, %v864
  %v868 = vsel %vm88, %v850, 0
  %v871 = vsel %vm88, %v851, 0
  %873 = vmatprep.subr.mxu0 0.0
  %v874 = vand.u32 %v852, 4294901760
  %875 = vmatpush1.msra.mxu0 %v874
  %876 = vmatprep.subr.mxu0 0.0
  %v877 = vand.u32 %v853, 4294901760
  %878 = vmatpush1.msra.mxu0 %v877
  %879 = vmatprep.subr.mxu0 0.0
  %v880 = vand.u32 %v854, 4294901760
  %881 = vmatpush1.msra.mxu0 %v880
  %882 = vmatprep.subr.mxu0 0.0
  %v883 = vand.u32 %v855, 4294901760
  %884 = vmatpush1.msra.mxu0 %v883
  %885 = vmatprep.subr.mxu0 0.0
  %v886 = vand.u32 %v856, 4294901760
  %887 = vmatpush1.msra.mxu0 %v886
  %888 = vmatprep.subr.mxu0 0.0
  %v889 = vand.u32 %v857, 4294901760
  %890 = vmatpush1.msra.mxu0 %v889
  %891 = vmatprep.subr.mxu0 0.0
  %v892 = vand.u32 %v858, 4294901760
  %893 = vmatpush1.msra.mxu0 %v892
  %894 = vmatprep.subr.mxu0 0.0
  %v895 = vand.u32 %v859, 4294901760
  %896 = vmatpush1.msra.mxu0 %v895
  %897 = vmatprep.subr.mxu0 0.0
  %898 = vmatpush1.msra.mxu0 0.0
  %899 = vmatprep.subr.mxu0 0.0
  %900 = vmatpush1.msra.mxu0 0.0
  %901 = vmatprep.subr.mxu0 0.0
  %902 = vmatpush1.msra.mxu0 0.0
  %903 = vmatprep.subr.mxu0 0.0
  %904 = vmatpush1.msra.mxu0 0.0
  %905 = vmatprep.subr.mxu0 0.0
  %906 = vmatpush1.msra.mxu0 0.0
  %907 = vmatprep.subr.mxu0 0.0
  %908 = vmatpush1.msra.mxu0 0.0
  %909 = vmatprep.subr.mxu0 0.0
  %910 = vmatpush1.msra.mxu0 0.0
  %911 = vmatprep.subr.mxu0 0.0
  %912 = vmatpush1.msra.mxu0 0.0
  %913 = vmatprep.subr.mxu0 0.0
  %914 = vmatpush1.msra.mxu0 0.0
  %915 = vmatprep.subr.mxu0 0.0
  %916 = vmatpush1.msra.mxu0 0.0
  %917 = vmatprep.subr.mxu0 0.0
  %918 = vmatpush1.msra.mxu0 0.0
  %919 = vmatprep.subr.mxu0 0.0
  %920 = vmatpush1.msra.mxu0 0.0
  %921 = vmatprep.subr.mxu0 0.0
  %922 = vmatpush1.msra.mxu0 0.0
  %923 = vmatprep.subr.mxu0 0.0
  %924 = vmatpush1.msra.mxu0 0.0
  %925 = vmatprep.subr.mxu0 0.0
  %926 = vmatpush1.msra.mxu0 0.0
  %927 = vmatprep.subr.mxu0 0.0
  %928 = vmatpush1.msra.mxu0 0.0
  %929 = vmatprep.subr.mxu0 0.0
  %930 = vmatpush1.msra.mxu0 0.0
  %931 = vmatprep.subr.mxu0 0.0
  %932 = vmatpush1.msra.mxu0 0.0
  %933 = vmatprep.subr.mxu0 0.0
  %934 = vmatpush1.msra.mxu0 0.0
  %935 = vmatprep.subr.mxu0 0.0
  %936 = vmatpush1.msra.mxu0 0.0
  %937 = vmatprep.subr.mxu0 0.0
  %938 = vmatpush1.msra.mxu0 0.0
  %939 = vmatprep.subr.mxu0 0.0
  %940 = vmatpush1.msra.mxu0 0.0
  %941 = vmatprep.subr.mxu0 0.0
  %942 = vmatpush1.msra.mxu0 0.0
  %943 = vmatprep.subr.mxu0 0.0
  %944 = vmatpush1.msra.mxu0 0.0
  %945 = vmatprep.mubr.f32.mxu0 0.0
  %v946 = vand.u32 %v868, 4294901760
  %v947 = vsub.f32 %v868, %v946
  %v948 = vand.u32 %v947, 4294901760
  %v949 = vsub.f32 %v947, %v948
  %v950 = vand.u32 %v949, 4294901760
  %951 = vmatmul.mubr.f32.gmra.mrb[0].mxu0 %v950
  %v952 = vpop.f32.mrb[0].mxu0
  %v953 = vadd.f32 %v865, %v952
  %v954 = vpop.f32.mrb[0].mxu0
  %955 = vmatprep.mubr.f32.mxu0 0.0
  %v956 = vand.u32 %v871, 4294901760
  %v957 = vsub.f32 %v871, %v956
  %v958 = vand.u32 %v957, 4294901760
  %v959 = vsub.f32 %v957, %v958
  %v960 = vand.u32 %v959, 4294901760
  %961 = vmatmul.mubr.f32.gmra.mrb[0].mxu0 %v960
  %v962 = vpop.f32.mrb[0].mxu0
  %v963 = vadd.f32 %v865, %v962
  %v964 = vpop.f32.mrb[0].mxu0
  %965 = vdwg.mxu0
  %966 = vmatprep.subr.mxu0 0.0
  %v967 = vand.u32 %v852, 4294901760
  %v968 = vsub.f32 %v852, %v967
  %v969 = vand.u32 %v968, 4294901760
  %v970 = vsub.f32 %v968, %v969
  %v971 = vand.u32 %v970, 4294901760
  %972 = vmatpush1.msra.mxu0 %v971
  %973 = vmatprep.subr.mxu0 0.0
  %v974 = vand.u32 %v853, 4294901760
  %v975 = vsub.f32 %v853, %v974
  %v976 = vand.u32 %v975, 4294901760
  %v977 = vsub.f32 %v975, %v976
  %v978 = vand.u32 %v977, 4294901760
  %979 = vmatpush1.msra.mxu0 %v978
  %980 = vmatprep.subr.mxu0 0.0
  %v981 = vand.u32 %v854, 4294901760
  %v982 = vsub.f32 %v854, %v981
  %v983 = vand.u32 %v982, 4294901760
  %v984 = vsub.f32 %v982, %v983
  %v985 = vand.u32 %v984, 4294901760
  %986 = vmatpush1.msra.mxu0 %v985
  %987 = vmatprep.subr.mxu0 0.0
  %v988 = vand.u32 %v855, 4294901760
  %v989 = vsub.f32 %v855, %v988
  %v990 = vand.u32 %v989, 4294901760
  %v991 = vsub.f32 %v989, %v990
  %v992 = vand.u32 %v991, 4294901760
  %993 = vmatpush1.msra.mxu0 %v992
  %994 = vmatprep.subr.mxu0 0.0
  %v995 = vand.u32 %v856, 4294901760
  %v996 = vsub.f32 %v856, %v995
  %v997 = vand.u32 %v996, 4294901760
  %v998 = vsub.f32 %v996, %v997
  %v999 = vand.u32 %v998, 4294901760
  %1000 = vmatpush1.msra.mxu0 %v999
  %1001 = vmatprep.subr.mxu0 0.0
  %v1002 = vand.u32 %v857, 4294901760
  %v1003 = vsub.f32 %v857, %v1002
  %v1004 = vand.u32 %v1003, 4294901760
  %v1005 = vsub.f32 %v1003, %v1004
  %v1006 = vand.u32 %v1005, 4294901760
  %1007 = vmatpush1.msra.mxu0 %v1006
  %1008 = vmatprep.subr.mxu0 0.0
  %v1009 = vand.u32 %v858, 4294901760
  %v1010 = vsub.f32 %v858, %v1009
  %v1011 = vand.u32 %v1010, 4294901760
  %v1012 = vsub.f32 %v1010, %v1011
  %v1013 = vand.u32 %v1012, 4294901760
  %1014 = vmatpush1.msra.mxu0 %v1013
  %1015 = vmatprep.subr.mxu0 0.0
  %v1016 = vand.u32 %v859, 4294901760
  %v1017 = vsub.f32 %v859, %v1016
  %v1018 = vand.u32 %v1017, 4294901760
  %v1019 = vsub.f32 %v1017, %v1018
  %v1020 = vand.u32 %v1019, 4294901760
  %1021 = vmatpush1.msra.mxu0 %v1020
  %1022 = vmatprep.subr.mxu0 0.0
  %1023 = vmatpush1.msra.mxu0 0.0
  %1024 = vmatprep.subr.mxu0 0.0
  %1025 = vmatpush1.msra.mxu0 0.0
  %1026 = vmatprep.subr.mxu0 0.0
  %1027 = vmatpush1.msra.mxu0 0.0
  %1028 = vmatprep.subr.mxu0 0.0
  %1029 = vmatpush1.msra.mxu0 0.0
  %1030 = vmatprep.subr.mxu0 0.0
  %1031 = vmatpush1.msra.mxu0 0.0
  %1032 = vmatprep.subr.mxu0 0.0
  %1033 = vmatpush1.msra.mxu0 0.0
  %1034 = vmatprep.subr.mxu0 0.0
  %1035 = vmatpush1.msra.mxu0 0.0
  %1036 = vmatprep.subr.mxu0 0.0
  %1037 = vmatpush1.msra.mxu0 0.0
  %1038 = vmatprep.subr.mxu0 0.0
  %1039 = vmatpush1.msra.mxu0 0.0
  %1040 = vmatprep.subr.mxu0 0.0
  %1041 = vmatpush1.msra.mxu0 0.0
  %1042 = vmatprep.subr.mxu0 0.0
  %1043 = vmatpush1.msra.mxu0 0.0
  %1044 = vmatprep.subr.mxu0 0.0
  %1045 = vmatpush1.msra.mxu0 0.0
  %1046 = vmatprep.subr.mxu0 0.0
  %1047 = vmatpush1.msra.mxu0 0.0
  %1048 = vmatprep.subr.mxu0 0.0
  %1049 = vmatpush1.msra.mxu0 0.0
  %1050 = vmatprep.subr.mxu0 0.0
  %1051 = vmatpush1.msra.mxu0 0.0
  %1052 = vmatprep.subr.mxu0 0.0
  %1053 = vmatpush1.msra.mxu0 0.0
  %1054 = vmatprep.subr.mxu0 0.0
  %1055 = vmatpush1.msra.mxu0 0.0
  %1056 = vmatprep.subr.mxu0 0.0
  %1057 = vmatpush1.msra.mxu0 0.0
  %1058 = vmatprep.subr.mxu0 0.0
  %1059 = vmatpush1.msra.mxu0 0.0
  %1060 = vmatprep.subr.mxu0 0.0
  %1061 = vmatpush1.msra.mxu0 0.0
  %1062 = vmatprep.subr.mxu0 0.0
  %1063 = vmatpush1.msra.mxu0 0.0
  %1064 = vmatprep.subr.mxu0 0.0
  %1065 = vmatpush1.msra.mxu0 0.0
  %1066 = vmatprep.subr.mxu0 0.0
  %1067 = vmatpush1.msra.mxu0 0.0
  %1068 = vmatprep.subr.mxu0 0.0
  %1069 = vmatpush1.msra.mxu0 0.0
  %1070 = vmatprep.mubr.f32.mxu0 0.0
  %v1071 = vand.u32 %v868, 4294901760
  %1072 = vmatmul.mubr.f32.gmra.mrb[0].mxu0 %v1071
  %v1073 = vpop.f32.mrb[0].mxu0
  %v1074 = vadd.f32 %v953, %v1073
  %v1075 = vpop.f32.mrb[0].mxu0
  %1076 = vmatprep.mubr.f32.mxu0 0.0
  %v1077 = vand.u32 %v871, 4294901760
  %1078 = vmatmul.mubr.f32.gmra.mrb[0].mxu0 %v1077
  %v1079 = vpop.f32.mrb[0].mxu0
  %v1080 = vadd.f32 %v963, %v1079
  %v1081 = vpop.f32.mrb[0].mxu0
  %1082 = vdwg.mxu0
  %1083 = vmatprep.subr.mxu0 0.0
  %v1084 = vand.u32 %v852, 4294901760
  %v1085 = vsub.f32 %v852, %v1084
  %1086 = vmatpush1.msra.mxu0 %v1085
  %1087 = vmatprep.subr.mxu0 0.0
  %v1088 = vand.u32 %v853, 4294901760
  %v1089 = vsub.f32 %v853, %v1088
  %1090 = vmatpush1.msra.mxu0 %v1089
  %1091 = vmatprep.subr.mxu0 0.0
  %v1092 = vand.u32 %v854, 4294901760
  %v1093 = vsub.f32 %v854, %v1092
  %1094 = vmatpush1.msra.mxu0 %v1093
  %1095 = vmatprep.subr.mxu0 0.0
  %v1096 = vand.u32 %v855, 4294901760
  %v1097 = vsub.f32 %v855, %v1096
  %1098 = vmatpush1.msra.mxu0 %v1097
  %1099 = vmatprep.subr.mxu0 0.0
  %v1100 = vand.u32 %v856, 4294901760
  %v1101 = vsub.f32 %v856, %v1100
  %1102 = vmatpush1.msra.mxu0 %v1101
  %1103 = vmatprep.subr.mxu0 0.0
  %v1104 = vand.u32 %v857, 4294901760
  %v1105 = vsub.f32 %v857, %v1104
  %1106 = vmatpush1.msra.mxu0 %v1105
  %1107 = vmatprep.subr.mxu0 0.0
  %v1108 = vand.u32 %v858, 4294901760
  %v1109 = vsub.f32 %v858, %v1108
  %1110 = vmatpush1.msra.mxu0 %v1109
  %1111 = vmatprep.subr.mxu0 0.0
  %v1112 = vand.u32 %v859, 4294901760
  %v1113 = vsub.f32 %v859, %v1112
  %1114 = vmatpush1.msra.mxu0 %v1113
  %1115 = vmatprep.subr.mxu0 0.0
  %1116 = vmatpush1.msra.mxu0 0.0
  %1117 = vmatprep.subr.mxu0 0.0
  %1118 = vmatpush1.msra.mxu0 0.0
  %1119 = vmatprep.subr.mxu0 0.0
  %1120 = vmatpush1.msra.mxu0 0.0
  %1121 = vmatprep.subr.mxu0 0.0
  %1122 = vmatpush1.msra.mxu0 0.0
  %1123 = vmatprep.subr.mxu0 0.0
  %1124 = vmatpush1.msra.mxu0 0.0
  %1125 = vmatprep.subr.mxu0 0.0
  %1126 = vmatpush1.msra.mxu0 0.0
  %1127 = vmatprep.subr.mxu0 0.0
  %1128 = vmatpush1.msra.mxu0 0.0
  %1129 = vmatprep.subr.mxu0 0.0
  %1130 = vmatpush1.msra.mxu0 0.0
  %1131 = vmatprep.subr.mxu0 0.0
  %1132 = vmatpush1.msra.mxu0 0.0
  %1133 = vmatprep.subr.mxu0 0.0
  %1134 = vmatpush1.msra.mxu0 0.0
  %1135 = vmatprep.subr.mxu0 0.0
  %1136 = vmatpush1.msra.mxu0 0.0
  %1137 = vmatprep.subr.mxu0 0.0
  %1138 = vmatpush1.msra.mxu0 0.0
  %1139 = vmatprep.subr.mxu0 0.0
  %1140 = vmatpush1.msra.mxu0 0.0
  %1141 = vmatprep.subr.mxu0 0.0
  %1142 = vmatpush1.msra.mxu0 0.0
  %1143 = vmatprep.subr.mxu0 0.0
  %1144 = vmatpush1.msra.mxu0 0.0
  %1145 = vmatprep.subr.mxu0 0.0
  %1146 = vmatpush1.msra.mxu0 0.0
  %1147 = vmatprep.subr.mxu0 0.0
  %1148 = vmatpush1.msra.mxu0 0.0
  %1149 = vmatprep.subr.mxu0 0.0
  %1150 = vmatpush1.msra.mxu0 0.0
  %1151 = vmatprep.subr.mxu0 0.0
  %1152 = vmatpush1.msra.mxu0 0.0
  %1153 = vmatprep.subr.mxu0 0.0
  %1154 = vmatpush1.msra.mxu0 0.0
  %1155 = vmatprep.subr.mxu0 0.0
  %1156 = vmatpush1.msra.mxu0 0.0
  %1157 = vmatprep.subr.mxu0 0.0
  %1158 = vmatpush1.msra.mxu0 0.0
  %1159 = vmatprep.subr.mxu0 0.0
  %1160 = vmatpush1.msra.mxu0 0.0
  %1161 = vmatprep.subr.mxu0 0.0
  %1162 = vmatpush1.msra.mxu0 0.0
  %1163 = vmatprep.mubr.f32.mxu0 0.0
  %v1164 = vand.u32 %v868, 4294901760
  %v1165 = vsub.f32 %v868, %v1164
  %1166 = vmatmul.mubr.f32.gmra.mrb[0].mxu0 %v1165
  %v1167 = vpop.f32.mrb[0].mxu0
  %v1168 = vadd.f32 %v1074, %v1167
  %v1169 = vpop.f32.mrb[0].mxu0
  %1170 = vmatprep.mubr.f32.mxu0 0.0
  %v1171 = vand.u32 %v871, 4294901760
  %v1172 = vsub.f32 %v871, %v1171
  %1173 = vmatmul.mubr.f32.gmra.mrb[0].mxu0 %v1172
  %v1174 = vpop.f32.mrb[0].mxu0
  %v1175 = vadd.f32 %v1080, %v1174
  %v1176 = vpop.f32.mrb[0].mxu0
  %1177 = vdwg.mxu0
  %1178 = vmatprep.subr.mxu0 0.0
  %v1179 = vand.u32 %v852, 4294901760
  %1180 = vmatpush1.msra.mxu0 %v1179
  %1181 = vmatprep.subr.mxu0 0.0
  %v1182 = vand.u32 %v853, 4294901760
  %1183 = vmatpush1.msra.mxu0 %v1182
  %1184 = vmatprep.subr.mxu0 0.0
  %v1185 = vand.u32 %v854, 4294901760
  %1186 = vmatpush1.msra.mxu0 %v1185
  %1187 = vmatprep.subr.mxu0 0.0
  %v1188 = vand.u32 %v855, 4294901760
  %1189 = vmatpush1.msra.mxu0 %v1188
  %1190 = vmatprep.subr.mxu0 0.0
  %v1191 = vand.u32 %v856, 4294901760
  %1192 = vmatpush1.msra.mxu0 %v1191
  %1193 = vmatprep.subr.mxu0 0.0
  %v1194 = vand.u32 %v857, 4294901760
  %1195 = vmatpush1.msra.mxu0 %v1194
  %1196 = vmatprep.subr.mxu0 0.0
  %v1197 = vand.u32 %v858, 4294901760
  %1198 = vmatpush1.msra.mxu0 %v1197
  %1199 = vmatprep.subr.mxu0 0.0
  %v1200 = vand.u32 %v859, 4294901760
  %1201 = vmatpush1.msra.mxu0 %v1200
  %1202 = vmatprep.subr.mxu0 0.0
  %1203 = vmatpush1.msra.mxu0 0.0
  %1204 = vmatprep.subr.mxu0 0.0
  %1205 = vmatpush1.msra.mxu0 0.0
  %1206 = vmatprep.subr.mxu0 0.0
  %1207 = vmatpush1.msra.mxu0 0.0
  %1208 = vmatprep.subr.mxu0 0.0
  %1209 = vmatpush1.msra.mxu0 0.0
  %1210 = vmatprep.subr.mxu0 0.0
  %1211 = vmatpush1.msra.mxu0 0.0
  %1212 = vmatprep.subr.mxu0 0.0
  %1213 = vmatpush1.msra.mxu0 0.0
  %1214 = vmatprep.subr.mxu0 0.0
  %1215 = vmatpush1.msra.mxu0 0.0
  %1216 = vmatprep.subr.mxu0 0.0
  %1217 = vmatpush1.msra.mxu0 0.0
  %1218 = vmatprep.subr.mxu0 0.0
  %1219 = vmatpush1.msra.mxu0 0.0
  %1220 = vmatprep.subr.mxu0 0.0
  %1221 = vmatpush1.msra.mxu0 0.0
  %1222 = vmatprep.subr.mxu0 0.0
  %1223 = vmatpush1.msra.mxu0 0.0
  %1224 = vmatprep.subr.mxu0 0.0
  %1225 = vmatpush1.msra.mxu0 0.0
  %1226 = vmatprep.subr.mxu0 0.0
  %1227 = vmatpush1.msra.mxu0 0.0
  %1228 = vmatprep.subr.mxu0 0.0
  %1229 = vmatpush1.msra.mxu0 0.0
  %1230 = vmatprep.subr.mxu0 0.0
  %1231 = vmatpush1.msra.mxu0 0.0
  %1232 = vmatprep.subr.mxu0 0.0
  %1233 = vmatpush1.msra.mxu0 0.0
  %1234 = vmatprep.subr.mxu0 0.0
  %1235 = vmatpush1.msra.mxu0 0.0
  %1236 = vmatprep.subr.mxu0 0.0
  %1237 = vmatpush1.msra.mxu0 0.0
  %1238 = vmatprep.subr.mxu0 0.0
  %1239 = vmatpush1.msra.mxu0 0.0
  %1240 = vmatprep.subr.mxu0 0.0
  %1241 = vmatpush1.msra.mxu0 0.0
  %1242 = vmatprep.subr.mxu0 0.0
  %1243 = vmatpush1.msra.mxu0 0.0
  %1244 = vmatprep.subr.mxu0 0.0
  %1245 = vmatpush1.msra.mxu0 0.0
  %1246 = vmatprep.subr.mxu0 0.0
  %1247 = vmatpush1.msra.mxu0 0.0
  %1248 = vmatprep.subr.mxu0 0.0
  %1249 = vmatpush1.msra.mxu0 0.0
  %1250 = vmatprep.mubr.f32.mxu0 0.0
  %v1251 = vand.u32 %v868, 4294901760
  %v1252 = vsub.f32 %v868, %v1251
  %v1253 = vand.u32 %v1252, 4294901760
  %1254 = vmatmul.mubr.f32.gmra.mrb[0].mxu0 %v1253
  %v1255 = vpop.f32.mrb[0].mxu0
  %v1256 = vadd.f32 %v1168, %v1255
  %v1257 = vpop.f32.mrb[0].mxu0
  %1258 = vmatprep.mubr.f32.mxu0 0.0
  %v1259 = vand.u32 %v871, 4294901760
  %v1260 = vsub.f32 %v871, %v1259
  %v1261 = vand.u32 %v1260, 4294901760
  %1262 = vmatmul.mubr.f32.gmra.mrb[0].mxu0 %v1261
  %v1263 = vpop.f32.mrb[0].mxu0
  %v1264 = vadd.f32 %v1175, %v1263
  %v1265 = vpop.f32.mrb[0].mxu0
  %1266 = vdwg.mxu0
  %1267 = vmatprep.subr.mxu0 0.0
  %v1268 = vand.u32 %v852, 4294901760
  %v1269 = vsub.f32 %v852, %v1268
  %v1270 = vand.u32 %v1269, 4294901760
  %1271 = vmatpush1.msra.mxu0 %v1270
  %1272 = vmatprep.subr.mxu0 0.0
  %v1273 = vand.u32 %v853, 4294901760
  %v1274 = vsub.f32 %v853, %v1273
  %v1275 = vand.u32 %v1274, 4294901760
  %1276 = vmatpush1.msra.mxu0 %v1275
  %1277 = vmatprep.subr.mxu0 0.0
  %v1278 = vand.u32 %v854, 4294901760
  %v1279 = vsub.f32 %v854, %v1278
  %v1280 = vand.u32 %v1279, 4294901760
  %1281 = vmatpush1.msra.mxu0 %v1280
  %1282 = vmatprep.subr.mxu0 0.0
  %v1283 = vand.u32 %v855, 4294901760
  %v1284 = vsub.f32 %v855, %v1283
  %v1285 = vand.u32 %v1284, 4294901760
  %1286 = vmatpush1.msra.mxu0 %v1285
  %1287 = vmatprep.subr.mxu0 0.0
  %v1288 = vand.u32 %v856, 4294901760
  %v1289 = vsub.f32 %v856, %v1288
  %v1290 = vand.u32 %v1289, 4294901760
  %1291 = vmatpush1.msra.mxu0 %v1290
  %1292 = vmatprep.subr.mxu0 0.0
  %v1293 = vand.u32 %v857, 4294901760
  %v1294 = vsub.f32 %v857, %v1293
  %v1295 = vand.u32 %v1294, 4294901760
  %1296 = vmatpush1.msra.mxu0 %v1295
  %1297 = vmatprep.subr.mxu0 0.0
  %v1298 = vand.u32 %v858, 4294901760
  %v1299 = vsub.f32 %v858, %v1298
  %v1300 = vand.u32 %v1299, 4294901760
  %1301 = vmatpush1.msra.mxu0 %v1300
  %1302 = vmatprep.subr.mxu0 0.0
  %v1303 = vand.u32 %v859, 4294901760
  %v1304 = vsub.f32 %v859, %v1303
  %v1305 = vand.u32 %v1304, 4294901760
  %1306 = vmatpush1.msra.mxu0 %v1305
  %1307 = vmatprep.subr.mxu0 0.0
  %1308 = vmatpush1.msra.mxu0 0.0
  %1309 = vmatprep.subr.mxu0 0.0
  %1310 = vmatpush1.msra.mxu0 0.0
  %1311 = vmatprep.subr.mxu0 0.0
  %1312 = vmatpush1.msra.mxu0 0.0
  %1313 = vmatprep.subr.mxu0 0.0
  %1314 = vmatpush1.msra.mxu0 0.0
  %1315 = vmatprep.subr.mxu0 0.0
  %1316 = vmatpush1.msra.mxu0 0.0
  %1317 = vmatprep.subr.mxu0 0.0
  %1318 = vmatpush1.msra.mxu0 0.0
  %1319 = vmatprep.subr.mxu0 0.0
  %1320 = vmatpush1.msra.mxu0 0.0
  %1321 = vmatprep.subr.mxu0 0.0
  %1322 = vmatpush1.msra.mxu0 0.0
  %1323 = vmatprep.subr.mxu0 0.0
  %1324 = vmatpush1.msra.mxu0 0.0
  %1325 = vmatprep.subr.mxu0 0.0
  %1326 = vmatpush1.msra.mxu0 0.0
  %1327 = vmatprep.subr.mxu0 0.0
  %1328 = vmatpush1.msra.mxu0 0.0
  %1329 = vmatprep.subr.mxu0 0.0
  %1330 = vmatpush1.msra.mxu0 0.0
  %1331 = vmatprep.subr.mxu0 0.0
  %1332 = vmatpush1.msra.mxu0 0.0
  %1333 = vmatprep.subr.mxu0 0.0
  %1334 = vmatpush1.msra.mxu0 0.0
  %1335 = vmatprep.subr.mxu0 0.0
  %1336 = vmatpush1.msra.mxu0 0.0
  %1337 = vmatprep.subr.mxu0 0.0
  %1338 = vmatpush1.msra.mxu0 0.0
  %1339 = vmatprep.subr.mxu0 0.0
  %1340 = vmatpush1.msra.mxu0 0.0
  %1341 = vmatprep.subr.mxu0 0.0
  %1342 = vmatpush1.msra.mxu0 0.0
  %1343 = vmatprep.subr.mxu0 0.0
  %1344 = vmatpush1.msra.mxu0 0.0
  %1345 = vmatprep.subr.mxu0 0.0
  %1346 = vmatpush1.msra.mxu0 0.0
  %1347 = vmatprep.subr.mxu0 0.0
  %1348 = vmatpush1.msra.mxu0 0.0
  %1349 = vmatprep.subr.mxu0 0.0
  %1350 = vmatpush1.msra.mxu0 0.0
  %1351 = vmatprep.subr.mxu0 0.0
  %1352 = vmatpush1.msra.mxu0 0.0
  %1353 = vmatprep.subr.mxu0 0.0
  %1354 = vmatpush1.msra.mxu0 0.0
  %1355 = vmatprep.mubr.f32.mxu0 0.0
  %v1356 = vand.u32 %v868, 4294901760
  %1357 = vmatmul.mubr.f32.gmra.mrb[0].mxu0 %v1356
  %v1358 = vpop.f32.mrb[0].mxu0
  %v1359 = vadd.f32 %v1256, %v1358
  %v1360 = vpop.f32.mrb[0].mxu0
  %1361 = vmatprep.mubr.f32.mxu0 0.0
  %v1362 = vand.u32 %v871, 4294901760
  %1363 = vmatmul.mubr.f32.gmra.mrb[0].mxu0 %v1362
  %v1364 = vpop.f32.mrb[0].mxu0
  %v1365 = vadd.f32 %v1264, %v1364
  %v1366 = vpop.f32.mrb[0].mxu0
  %1367 = vdwg.mxu0
  %1368 = vmatprep.subr.mxu0 0.0
  %v1369 = vand.u32 %v852, 4294901760
  %1370 = vmatpush1.msra.mxu0 %v1369
  %1371 = vmatprep.subr.mxu0 0.0
  %v1372 = vand.u32 %v853, 4294901760
  %1373 = vmatpush1.msra.mxu0 %v1372
  %1374 = vmatprep.subr.mxu0 0.0
  %v1375 = vand.u32 %v854, 4294901760
  %1376 = vmatpush1.msra.mxu0 %v1375
  %1377 = vmatprep.subr.mxu0 0.0
  %v1378 = vand.u32 %v855, 4294901760
  %1379 = vmatpush1.msra.mxu0 %v1378
  %1380 = vmatprep.subr.mxu0 0.0
  %v1381 = vand.u32 %v856, 4294901760
  %1382 = vmatpush1.msra.mxu0 %v1381
  %1383 = vmatprep.subr.mxu0 0.0
  %v1384 = vand.u32 %v857, 4294901760
  %1385 = vmatpush1.msra.mxu0 %v1384
  %1386 = vmatprep.subr.mxu0 0.0
  %v1387 = vand.u32 %v858, 4294901760
  %1388 = vmatpush1.msra.mxu0 %v1387
  %1389 = vmatprep.subr.mxu0 0.0
  %v1390 = vand.u32 %v859, 4294901760
  %1391 = vmatpush1.msra.mxu0 %v1390
  %1392 = vmatprep.subr.mxu0 0.0
  %1393 = vmatpush1.msra.mxu0 0.0
  %1394 = vmatprep.subr.mxu0 0.0
  %1395 = vmatpush1.msra.mxu0 0.0
  %1396 = vmatprep.subr.mxu0 0.0
  %1397 = vmatpush1.msra.mxu0 0.0
  %1398 = vmatprep.subr.mxu0 0.0
  %1399 = vmatpush1.msra.mxu0 0.0
  %1400 = vmatprep.subr.mxu0 0.0
  %1401 = vmatpush1.msra.mxu0 0.0
  %1402 = vmatprep.subr.mxu0 0.0
  %1403 = vmatpush1.msra.mxu0 0.0
  %1404 = vmatprep.subr.mxu0 0.0
  %1405 = vmatpush1.msra.mxu0 0.0
  %1406 = vmatprep.subr.mxu0 0.0
  %1407 = vmatpush1.msra.mxu0 0.0
  %1408 = vmatprep.subr.mxu0 0.0
  %1409 = vmatpush1.msra.mxu0 0.0
  %1410 = vmatprep.subr.mxu0 0.0
  %1411 = vmatpush1.msra.mxu0 0.0
  %1412 = vmatprep.subr.mxu0 0.0
  %1413 = vmatpush1.msra.mxu0 0.0
  %1414 = vmatprep.subr.mxu0 0.0
  %1415 = vmatpush1.msra.mxu0 0.0
  %1416 = vmatprep.subr.mxu0 0.0
  %1417 = vmatpush1.msra.mxu0 0.0
  %1418 = vmatprep.subr.mxu0 0.0
  %1419 = vmatpush1.msra.mxu0 0.0
  %1420 = vmatprep.subr.mxu0 0.0
  %1421 = vmatpush1.msra.mxu0 0.0
  %1422 = vmatprep.subr.mxu0 0.0
  %1423 = vmatpush1.msra.mxu0 0.0
  %1424 = vmatprep.subr.mxu0 0.0
  %1425 = vmatpush1.msra.mxu0 0.0
  %1426 = vmatprep.subr.mxu0 0.0
  %1427 = vmatpush1.msra.mxu0 0.0
  %1428 = vmatprep.subr.mxu0 0.0
  %1429 = vmatpush1.msra.mxu0 0.0
  %1430 = vmatprep.subr.mxu0 0.0
  %1431 = vmatpush1.msra.mxu0 0.0
  %1432 = vmatprep.subr.mxu0 0.0
  %1433 = vmatpush1.msra.mxu0 0.0
  %1434 = vmatprep.subr.mxu0 0.0
  %1435 = vmatpush1.msra.mxu0 0.0
  %1436 = vmatprep.subr.mxu0 0.0
  %1437 = vmatpush1.msra.mxu0 0.0
  %1438 = vmatprep.subr.mxu0 0.0
  %1439 = vmatpush1.msra.mxu0 0.0
  %1440 = vmatprep.mubr.f32.mxu0 0.0
  %v1441 = vand.u32 %v868, 4294901760
  %1442 = vmatmul.mubr.f32.gmra.mrb[0].mxu0 %v1441
  %v1443 = vpop.f32.mrb[0].mxu0
  %v1444 = vadd.f32 %v1359, %v1443
  %v1445 = vpop.f32.mrb[0].mxu0
  %1446 = vmatprep.mubr.f32.mxu0 0.0
  %v1447 = vand.u32 %v871, 4294901760
  %1448 = vmatmul.mubr.f32.gmra.mrb[0].mxu0 %v1447
  %v1449 = vpop.f32.mrb[0].mxu0
  %v1450 = vadd.f32 %v1365, %v1449
  %v1451 = vpop.f32.mrb[0].mxu0
  %1452 = vdwg.mxu0
  %v1453 = vmax.f32 %v1444, 0.0
  %v1454 = vmax.f32 %v1450, 0.0
  %v1455 = vld [vmem:[%s6] sm:$0xff]
  %v1456 = vld [vmem:[%s6 + $0x8] sm:$0xff]
  %v1457 = vld [vmem:[%s6 + $0x10] sm:$0xff]
  %v1458 = vld [vmem:[%s6 + $0x18] sm:$0xff]
  %v1459 = vld [vmem:[%s7] sm:$0x1]
  %v1461 = vlaneseq
  %v1462 = vshrl.u32 %v1461, 7
  %v1463 = vsub.s32 0, %v1462
  %v1464 = vrot.slane %v1459, %v1463
  %vm1466 = vcmask 261120
  %v1468 = vsel %vm1466, %v1453, 0
  %v1471 = vsel %vm1466, %v1454, 0
  %1473 = vmatprep.subr.mxu0 0.0
  %v1474 = vand.u32 %v1455, 4294901760
  %1475 = vmatpush1.msra.mxu0 %v1474
  %1476 = vmatprep.subr.mxu0 0.0
  %v1477 = vand.u32 %v1456, 4294901760
  %1478 = vmatpush1.msra.mxu0 %v1477
  %1479 = vmatprep.subr.mxu0 0.0
  %v1480 = vand.u32 %v1457, 4294901760
  %1481 = vmatpush1.msra.mxu0 %v1480
  %1482 = vmatprep.subr.mxu0 0.0
  %v1483 = vand.u32 %v1458, 4294901760
  %1484 = vmatpush1.msra.mxu0 %v1483
  %1485 = vmatprep.subr.mxu0 0.0
  %1486 = vmatpush1.msra.mxu0 0.0
  %1487 = vmatprep.subr.mxu0 0.0
  %1488 = vmatpush1.msra.mxu0 0.0
  %1489 = vmatprep.subr.mxu0 0.0
  %1490 = vmatpush1.msra.mxu0 0.0
  %1491 = vmatprep.subr.mxu0 0.0
  %1492 = vmatpush1.msra.mxu0 0.0
  %1493 = vmatprep.subr.mxu0 0.0
  %1494 = vmatpush1.msra.mxu0 0.0
  %1495 = vmatprep.subr.mxu0 0.0
  %1496 = vmatpush1.msra.mxu0 0.0
  %1497 = vmatprep.subr.mxu0 0.0
  %1498 = vmatpush1.msra.mxu0 0.0
  %1499 = vmatprep.subr.mxu0 0.0
  %1500 = vmatpush1.msra.mxu0 0.0
  %1501 = vmatprep.subr.mxu0 0.0
  %1502 = vmatpush1.msra.mxu0 0.0
  %1503 = vmatprep.subr.mxu0 0.0
  %1504 = vmatpush1.msra.mxu0 0.0
  %1505 = vmatprep.subr.mxu0 0.0
  %1506 = vmatpush1.msra.mxu0 0.0
  %1507 = vmatprep.subr.mxu0 0.0
  %1508 = vmatpush1.msra.mxu0 0.0
  %1509 = vmatprep.subr.mxu0 0.0
  %1510 = vmatpush1.msra.mxu0 0.0
  %1511 = vmatprep.subr.mxu0 0.0
  %1512 = vmatpush1.msra.mxu0 0.0
  %1513 = vmatprep.subr.mxu0 0.0
  %1514 = vmatpush1.msra.mxu0 0.0
  %1515 = vmatprep.subr.mxu0 0.0
  %1516 = vmatpush1.msra.mxu0 0.0
  %1517 = vmatprep.subr.mxu0 0.0
  %1518 = vmatpush1.msra.mxu0 0.0
  %1519 = vmatprep.subr.mxu0 0.0
  %1520 = vmatpush1.msra.mxu0 0.0
  %1521 = vmatprep.subr.mxu0 0.0
  %1522 = vmatpush1.msra.mxu0 0.0
  %1523 = vmatprep.subr.mxu0 0.0
  %1524 = vmatpush1.msra.mxu0 0.0
  %1525 = vmatprep.subr.mxu0 0.0
  %1526 = vmatpush1.msra.mxu0 0.0
  %1527 = vmatprep.subr.mxu0 0.0
  %1528 = vmatpush1.msra.mxu0 0.0
  %1529 = vmatprep.subr.mxu0 0.0
  %1530 = vmatpush1.msra.mxu0 0.0
  %1531 = vmatprep.subr.mxu0 0.0
  %1532 = vmatpush1.msra.mxu0 0.0
  %1533 = vmatprep.subr.mxu0 0.0
  %1534 = vmatpush1.msra.mxu0 0.0
  %1535 = vmatprep.subr.mxu0 0.0
  %1536 = vmatpush1.msra.mxu0 0.0
  %1537 = vmatprep.subr.mxu0 0.0
  %1538 = vmatpush1.msra.mxu0 0.0
  %1539 = vmatprep.subr.mxu0 0.0
  %1540 = vmatpush1.msra.mxu0 0.0
  %1541 = vmatprep.mubr.f32.mxu0 0.0
  %v1542 = vand.u32 %v1468, 4294901760
  %v1543 = vsub.f32 %v1468, %v1542
  %v1544 = vand.u32 %v1543, 4294901760
  %v1545 = vsub.f32 %v1543, %v1544
  %v1546 = vand.u32 %v1545, 4294901760
  %1547 = vmatmul.mubr.f32.gmra.mrb[0].mxu0 %v1546
  %v1548 = vpop.f32.mrb[0].mxu0
  %v1549 = vadd.f32 %v1464, %v1548
  %v1550 = vpop.f32.mrb[0].mxu0
  %1551 = vmatprep.mubr.f32.mxu0 0.0
  %v1552 = vand.u32 %v1471, 4294901760
  %v1553 = vsub.f32 %v1471, %v1552
  %v1554 = vand.u32 %v1553, 4294901760
  %v1555 = vsub.f32 %v1553, %v1554
  %v1556 = vand.u32 %v1555, 4294901760
  %1557 = vmatmul.mubr.f32.gmra.mrb[0].mxu0 %v1556
  %v1558 = vpop.f32.mrb[0].mxu0
  %v1559 = vadd.f32 %v1464, %v1558
  %v1560 = vpop.f32.mrb[0].mxu0
  %1561 = vdwg.mxu0
  %1562 = vmatprep.subr.mxu0 0.0
  %v1563 = vand.u32 %v1455, 4294901760
  %v1564 = vsub.f32 %v1455, %v1563
  %v1565 = vand.u32 %v1564, 4294901760
  %v1566 = vsub.f32 %v1564, %v1565
  %v1567 = vand.u32 %v1566, 4294901760
  %1568 = vmatpush1.msra.mxu0 %v1567
  %1569 = vmatprep.subr.mxu0 0.0
  %v1570 = vand.u32 %v1456, 4294901760
  %v1571 = vsub.f32 %v1456, %v1570
  %v1572 = vand.u32 %v1571, 4294901760
  %v1573 = vsub.f32 %v1571, %v1572
  %v1574 = vand.u32 %v1573, 4294901760
  %1575 = vmatpush1.msra.mxu0 %v1574
  %1576 = vmatprep.subr.mxu0 0.0
  %v1577 = vand.u32 %v1457, 4294901760
  %v1578 = vsub.f32 %v1457, %v1577
  %v1579 = vand.u32 %v1578, 4294901760
  %v1580 = vsub.f32 %v1578, %v1579
  %v1581 = vand.u32 %v1580, 4294901760
  %1582 = vmatpush1.msra.mxu0 %v1581
  %1583 = vmatprep.subr.mxu0 0.0
  %v1584 = vand.u32 %v1458, 4294901760
  %v1585 = vsub.f32 %v1458, %v1584
  %v1586 = vand.u32 %v1585, 4294901760
  %v1587 = vsub.f32 %v1585, %v1586
  %v1588 = vand.u32 %v1587, 4294901760
  %1589 = vmatpush1.msra.mxu0 %v1588
  %1590 = vmatprep.subr.mxu0 0.0
  %1591 = vmatpush1.msra.mxu0 0.0
  %1592 = vmatprep.subr.mxu0 0.0
  %1593 = vmatpush1.msra.mxu0 0.0
  %1594 = vmatprep.subr.mxu0 0.0
  %1595 = vmatpush1.msra.mxu0 0.0
  %1596 = vmatprep.subr.mxu0 0.0
  %1597 = vmatpush1.msra.mxu0 0.0
  %1598 = vmatprep.subr.mxu0 0.0
  %1599 = vmatpush1.msra.mxu0 0.0
  %1600 = vmatprep.subr.mxu0 0.0
  %1601 = vmatpush1.msra.mxu0 0.0
  %1602 = vmatprep.subr.mxu0 0.0
  %1603 = vmatpush1.msra.mxu0 0.0
  %1604 = vmatprep.subr.mxu0 0.0
  %1605 = vmatpush1.msra.mxu0 0.0
  %1606 = vmatprep.subr.mxu0 0.0
  %1607 = vmatpush1.msra.mxu0 0.0
  %1608 = vmatprep.subr.mxu0 0.0
  %1609 = vmatpush1.msra.mxu0 0.0
  %1610 = vmatprep.subr.mxu0 0.0
  %1611 = vmatpush1.msra.mxu0 0.0
  %1612 = vmatprep.subr.mxu0 0.0
  %1613 = vmatpush1.msra.mxu0 0.0
  %1614 = vmatprep.subr.mxu0 0.0
  %1615 = vmatpush1.msra.mxu0 0.0
  %1616 = vmatprep.subr.mxu0 0.0
  %1617 = vmatpush1.msra.mxu0 0.0
  %1618 = vmatprep.subr.mxu0 0.0
  %1619 = vmatpush1.msra.mxu0 0.0
  %1620 = vmatprep.subr.mxu0 0.0
  %1621 = vmatpush1.msra.mxu0 0.0
  %1622 = vmatprep.subr.mxu0 0.0
  %1623 = vmatpush1.msra.mxu0 0.0
  %1624 = vmatprep.subr.mxu0 0.0
  %1625 = vmatpush1.msra.mxu0 0.0
  %1626 = vmatprep.subr.mxu0 0.0
  %1627 = vmatpush1.msra.mxu0 0.0
  %1628 = vmatprep.subr.mxu0 0.0
  %1629 = vmatpush1.msra.mxu0 0.0
  %1630 = vmatprep.subr.mxu0 0.0
  %1631 = vmatpush1.msra.mxu0 0.0
  %1632 = vmatprep.subr.mxu0 0.0
  %1633 = vmatpush1.msra.mxu0 0.0
  %1634 = vmatprep.subr.mxu0 0.0
  %1635 = vmatpush1.msra.mxu0 0.0
  %1636 = vmatprep.subr.mxu0 0.0
  %1637 = vmatpush1.msra.mxu0 0.0
  %1638 = vmatprep.subr.mxu0 0.0
  %1639 = vmatpush1.msra.mxu0 0.0
  %1640 = vmatprep.subr.mxu0 0.0
  %1641 = vmatpush1.msra.mxu0 0.0
  %1642 = vmatprep.subr.mxu0 0.0
  %1643 = vmatpush1.msra.mxu0 0.0
  %1644 = vmatprep.subr.mxu0 0.0
  %1645 = vmatpush1.msra.mxu0 0.0
  %1646 = vmatprep.mubr.f32.mxu0 0.0
  %v1647 = vand.u32 %v1468, 4294901760
  %1648 = vmatmul.mubr.f32.gmra.mrb[0].mxu0 %v1647
  %v1649 = vpop.f32.mrb[0].mxu0
  %v1650 = vadd.f32 %v1549, %v1649
  %v1651 = vpop.f32.mrb[0].mxu0
  %1652 = vmatprep.mubr.f32.mxu0 0.0
  %v1653 = vand.u32 %v1471, 4294901760
  %1654 = vmatmul.mubr.f32.gmra.mrb[0].mxu0 %v1653
  %v1655 = vpop.f32.mrb[0].mxu0
  %v1656 = vadd.f32 %v1559, %v1655
  %v1657 = vpop.f32.mrb[0].mxu0
  %1658 = vdwg.mxu0
  %1659 = vmatprep.subr.mxu0 0.0
  %v1660 = vand.u32 %v1455, 4294901760
  %v1661 = vsub.f32 %v1455, %v1660
  %1662 = vmatpush1.msra.mxu0 %v1661
  %1663 = vmatprep.subr.mxu0 0.0
  %v1664 = vand.u32 %v1456, 4294901760
  %v1665 = vsub.f32 %v1456, %v1664
  %1666 = vmatpush1.msra.mxu0 %v1665
  %1667 = vmatprep.subr.mxu0 0.0
  %v1668 = vand.u32 %v1457, 4294901760
  %v1669 = vsub.f32 %v1457, %v1668
  %1670 = vmatpush1.msra.mxu0 %v1669
  %1671 = vmatprep.subr.mxu0 0.0
  %v1672 = vand.u32 %v1458, 4294901760
  %v1673 = vsub.f32 %v1458, %v1672
  %1674 = vmatpush1.msra.mxu0 %v1673
  %1675 = vmatprep.subr.mxu0 0.0
  %1676 = vmatpush1.msra.mxu0 0.0
  %1677 = vmatprep.subr.mxu0 0.0
  %1678 = vmatpush1.msra.mxu0 0.0
  %1679 = vmatprep.subr.mxu0 0.0
  %1680 = vmatpush1.msra.mxu0 0.0
  %1681 = vmatprep.subr.mxu0 0.0
  %1682 = vmatpush1.msra.mxu0 0.0
  %1683 = vmatprep.subr.mxu0 0.0
  %1684 = vmatpush1.msra.mxu0 0.0
  %1685 = vmatprep.subr.mxu0 0.0
  %1686 = vmatpush1.msra.mxu0 0.0
  %1687 = vmatprep.subr.mxu0 0.0
  %1688 = vmatpush1.msra.mxu0 0.0
  %1689 = vmatprep.subr.mxu0 0.0
  %1690 = vmatpush1.msra.mxu0 0.0
  %1691 = vmatprep.subr.mxu0 0.0
  %1692 = vmatpush1.msra.mxu0 0.0
  %1693 = vmatprep.subr.mxu0 0.0
  %1694 = vmatpush1.msra.mxu0 0.0
  %1695 = vmatprep.subr.mxu0 0.0
  %1696 = vmatpush1.msra.mxu0 0.0
  %1697 = vmatprep.subr.mxu0 0.0
  %1698 = vmatpush1.msra.mxu0 0.0
  %1699 = vmatprep.subr.mxu0 0.0
  %1700 = vmatpush1.msra.mxu0 0.0
  %1701 = vmatprep.subr.mxu0 0.0
  %1702 = vmatpush1.msra.mxu0 0.0
  %1703 = vmatprep.subr.mxu0 0.0
  %1704 = vmatpush1.msra.mxu0 0.0
  %1705 = vmatprep.subr.mxu0 0.0
  %1706 = vmatpush1.msra.mxu0 0.0
  %1707 = vmatprep.subr.mxu0 0.0
  %1708 = vmatpush1.msra.mxu0 0.0
  %1709 = vmatprep.subr.mxu0 0.0
  %1710 = vmatpush1.msra.mxu0 0.0
  %1711 = vmatprep.subr.mxu0 0.0
  %1712 = vmatpush1.msra.mxu0 0.0
  %1713 = vmatprep.subr.mxu0 0.0
  %1714 = vmatpush1.msra.mxu0 0.0
  %1715 = vmatprep.subr.mxu0 0.0
  %1716 = vmatpush1.msra.mxu0 0.0
  %1717 = vmatprep.subr.mxu0 0.0
  %1718 = vmatpush1.msra.mxu0 0.0
  %1719 = vmatprep.subr.mxu0 0.0
  %1720 = vmatpush1.msra.mxu0 0.0
  %1721 = vmatprep.subr.mxu0 0.0
  %1722 = vmatpush1.msra.mxu0 0.0
  %1723 = vmatprep.subr.mxu0 0.0
  %1724 = vmatpush1.msra.mxu0 0.0
  %1725 = vmatprep.subr.mxu0 0.0
  %1726 = vmatpush1.msra.mxu0 0.0
  %1727 = vmatprep.subr.mxu0 0.0
  %1728 = vmatpush1.msra.mxu0 0.0
  %1729 = vmatprep.subr.mxu0 0.0
  %1730 = vmatpush1.msra.mxu0 0.0
  %1731 = vmatprep.mubr.f32.mxu0 0.0
  %v1732 = vand.u32 %v1468, 4294901760
  %v1733 = vsub.f32 %v1468, %v1732
  %1734 = vmatmul.mubr.f32.gmra.mrb[0].mxu0 %v1733
  %v1735 = vpop.f32.mrb[0].mxu0
  %v1736 = vadd.f32 %v1650, %v1735
  %v1737 = vpop.f32.mrb[0].mxu0
  %1738 = vmatprep.mubr.f32.mxu0 0.0
  %v1739 = vand.u32 %v1471, 4294901760
  %v1740 = vsub.f32 %v1471, %v1739
  %1741 = vmatmul.mubr.f32.gmra.mrb[0].mxu0 %v1740
  %v1742 = vpop.f32.mrb[0].mxu0
  %v1743 = vadd.f32 %v1656, %v1742
  %v1744 = vpop.f32.mrb[0].mxu0
  %1745 = vdwg.mxu0
  %1746 = vmatprep.subr.mxu0 0.0
  %v1747 = vand.u32 %v1455, 4294901760
  %1748 = vmatpush1.msra.mxu0 %v1747
  %1749 = vmatprep.subr.mxu0 0.0
  %v1750 = vand.u32 %v1456, 4294901760
  %1751 = vmatpush1.msra.mxu0 %v1750
  %1752 = vmatprep.subr.mxu0 0.0
  %v1753 = vand.u32 %v1457, 4294901760
  %1754 = vmatpush1.msra.mxu0 %v1753
  %1755 = vmatprep.subr.mxu0 0.0
  %v1756 = vand.u32 %v1458, 4294901760
  %1757 = vmatpush1.msra.mxu0 %v1756
  %1758 = vmatprep.subr.mxu0 0.0
  %1759 = vmatpush1.msra.mxu0 0.0
  %1760 = vmatprep.subr.mxu0 0.0
  %1761 = vmatpush1.msra.mxu0 0.0
  %1762 = vmatprep.subr.mxu0 0.0
  %1763 = vmatpush1.msra.mxu0 0.0
  %1764 = vmatprep.subr.mxu0 0.0
  %1765 = vmatpush1.msra.mxu0 0.0
  %1766 = vmatprep.subr.mxu0 0.0
  %1767 = vmatpush1.msra.mxu0 0.0
  %1768 = vmatprep.subr.mxu0 0.0
  %1769 = vmatpush1.msra.mxu0 0.0
  %1770 = vmatprep.subr.mxu0 0.0
  %1771 = vmatpush1.msra.mxu0 0.0
  %1772 = vmatprep.subr.mxu0 0.0
  %1773 = vmatpush1.msra.mxu0 0.0
  %1774 = vmatprep.subr.mxu0 0.0
  %1775 = vmatpush1.msra.mxu0 0.0
  %1776 = vmatprep.subr.mxu0 0.0
  %1777 = vmatpush1.msra.mxu0 0.0
  %1778 = vmatprep.subr.mxu0 0.0
  %1779 = vmatpush1.msra.mxu0 0.0
  %1780 = vmatprep.subr.mxu0 0.0
  %1781 = vmatpush1.msra.mxu0 0.0
  %1782 = vmatprep.subr.mxu0 0.0
  %1783 = vmatpush1.msra.mxu0 0.0
  %1784 = vmatprep.subr.mxu0 0.0
  %1785 = vmatpush1.msra.mxu0 0.0
  %1786 = vmatprep.subr.mxu0 0.0
  %1787 = vmatpush1.msra.mxu0 0.0
  %1788 = vmatprep.subr.mxu0 0.0
  %1789 = vmatpush1.msra.mxu0 0.0
  %1790 = vmatprep.subr.mxu0 0.0
  %1791 = vmatpush1.msra.mxu0 0.0
  %1792 = vmatprep.subr.mxu0 0.0
  %1793 = vmatpush1.msra.mxu0 0.0
  %1794 = vmatprep.subr.mxu0 0.0
  %1795 = vmatpush1.msra.mxu0 0.0
  %1796 = vmatprep.subr.mxu0 0.0
  %1797 = vmatpush1.msra.mxu0 0.0
  %1798 = vmatprep.subr.mxu0 0.0
  %1799 = vmatpush1.msra.mxu0 0.0
  %1800 = vmatprep.subr.mxu0 0.0
  %1801 = vmatpush1.msra.mxu0 0.0
  %1802 = vmatprep.subr.mxu0 0.0
  %1803 = vmatpush1.msra.mxu0 0.0
  %1804 = vmatprep.subr.mxu0 0.0
  %1805 = vmatpush1.msra.mxu0 0.0
  %1806 = vmatprep.subr.mxu0 0.0
  %1807 = vmatpush1.msra.mxu0 0.0
  %1808 = vmatprep.subr.mxu0 0.0
  %1809 = vmatpush1.msra.mxu0 0.0
  %1810 = vmatprep.subr.mxu0 0.0
  %1811 = vmatpush1.msra.mxu0 0.0
  %1812 = vmatprep.subr.mxu0 0.0
  %1813 = vmatpush1.msra.mxu0 0.0
  %1814 = vmatprep.mubr.f32.mxu0 0.0
  %v1815 = vand.u32 %v1468, 4294901760
  %v1816 = vsub.f32 %v1468, %v1815
  %v1817 = vand.u32 %v1816, 4294901760
  %1818 = vmatmul.mubr.f32.gmra.mrb[0].mxu0 %v1817
  %v1819 = vpop.f32.mrb[0].mxu0
  %v1820 = vadd.f32 %v1736, %v1819
  %v1821 = vpop.f32.mrb[0].mxu0
  %1822 = vmatprep.mubr.f32.mxu0 0.0
  %v1823 = vand.u32 %v1471, 4294901760
  %v1824 = vsub.f32 %v1471, %v1823
  %v1825 = vand.u32 %v1824, 4294901760
  %1826 = vmatmul.mubr.f32.gmra.mrb[0].mxu0 %v1825
  %v1827 = vpop.f32.mrb[0].mxu0
  %v1828 = vadd.f32 %v1743, %v1827
  %v1829 = vpop.f32.mrb[0].mxu0
  %1830 = vdwg.mxu0
  %1831 = vmatprep.subr.mxu0 0.0
  %v1832 = vand.u32 %v1455, 4294901760
  %v1833 = vsub.f32 %v1455, %v1832
  %v1834 = vand.u32 %v1833, 4294901760
  %1835 = vmatpush1.msra.mxu0 %v1834
  %1836 = vmatprep.subr.mxu0 0.0
  %v1837 = vand.u32 %v1456, 4294901760
  %v1838 = vsub.f32 %v1456, %v1837
  %v1839 = vand.u32 %v1838, 4294901760
  %1840 = vmatpush1.msra.mxu0 %v1839
  %1841 = vmatprep.subr.mxu0 0.0
  %v1842 = vand.u32 %v1457, 4294901760
  %v1843 = vsub.f32 %v1457, %v1842
  %v1844 = vand.u32 %v1843, 4294901760
  %1845 = vmatpush1.msra.mxu0 %v1844
  %1846 = vmatprep.subr.mxu0 0.0
  %v1847 = vand.u32 %v1458, 4294901760
  %v1848 = vsub.f32 %v1458, %v1847
  %v1849 = vand.u32 %v1848, 4294901760
  %1850 = vmatpush1.msra.mxu0 %v1849
  %1851 = vmatprep.subr.mxu0 0.0
  %1852 = vmatpush1.msra.mxu0 0.0
  %1853 = vmatprep.subr.mxu0 0.0
  %1854 = vmatpush1.msra.mxu0 0.0
  %1855 = vmatprep.subr.mxu0 0.0
  %1856 = vmatpush1.msra.mxu0 0.0
  %1857 = vmatprep.subr.mxu0 0.0
  %1858 = vmatpush1.msra.mxu0 0.0
  %1859 = vmatprep.subr.mxu0 0.0
  %1860 = vmatpush1.msra.mxu0 0.0
  %1861 = vmatprep.subr.mxu0 0.0
  %1862 = vmatpush1.msra.mxu0 0.0
  %1863 = vmatprep.subr.mxu0 0.0
  %1864 = vmatpush1.msra.mxu0 0.0
  %1865 = vmatprep.subr.mxu0 0.0
  %1866 = vmatpush1.msra.mxu0 0.0
  %1867 = vmatprep.subr.mxu0 0.0
  %1868 = vmatpush1.msra.mxu0 0.0
  %1869 = vmatprep.subr.mxu0 0.0
  %1870 = vmatpush1.msra.mxu0 0.0
  %1871 = vmatprep.subr.mxu0 0.0
  %1872 = vmatpush1.msra.mxu0 0.0
  %1873 = vmatprep.subr.mxu0 0.0
  %1874 = vmatpush1.msra.mxu0 0.0
  %1875 = vmatprep.subr.mxu0 0.0
  %1876 = vmatpush1.msra.mxu0 0.0
  %1877 = vmatprep.subr.mxu0 0.0
  %1878 = vmatpush1.msra.mxu0 0.0
  %1879 = vmatprep.subr.mxu0 0.0
  %1880 = vmatpush1.msra.mxu0 0.0
  %1881 = vmatprep.subr.mxu0 0.0
  %1882 = vmatpush1.msra.mxu0 0.0
  %1883 = vmatprep.subr.mxu0 0.0
  %1884 = vmatpush1.msra.mxu0 0.0
  %1885 = vmatprep.subr.mxu0 0.0
  %1886 = vmatpush1.msra.mxu0 0.0
  %1887 = vmatprep.subr.mxu0 0.0
  %1888 = vmatpush1.msra.mxu0 0.0
  %1889 = vmatprep.subr.mxu0 0.0
  %1890 = vmatpush1.msra.mxu0 0.0
  %1891 = vmatprep.subr.mxu0 0.0
  %1892 = vmatpush1.msra.mxu0 0.0
  %1893 = vmatprep.subr.mxu0 0.0
  %1894 = vmatpush1.msra.mxu0 0.0
  %1895 = vmatprep.subr.mxu0 0.0
  %1896 = vmatpush1.msra.mxu0 0.0
  %1897 = vmatprep.subr.mxu0 0.0
  %1898 = vmatpush1.msra.mxu0 0.0
  %1899 = vmatprep.subr.mxu0 0.0
  %1900 = vmatpush1.msra.mxu0 0.0
  %1901 = vmatprep.subr.mxu0 0.0
  %1902 = vmatpush1.msra.mxu0 0.0
  %1903 = vmatprep.subr.mxu0 0.0
  %1904 = vmatpush1.msra.mxu0 0.0
  %1905 = vmatprep.subr.mxu0 0.0
  %1906 = vmatpush1.msra.mxu0 0.0
  %1907 = vmatprep.mubr.f32.mxu0 0.0
  %v1908 = vand.u32 %v1468, 4294901760
  %1909 = vmatmul.mubr.f32.gmra.mrb[0].mxu0 %v1908
  %v1910 = vpop.f32.mrb[0].mxu0
  %v1911 = vadd.f32 %v1820, %v1910
  %v1912 = vpop.f32.mrb[0].mxu0
  %1913 = vmatprep.mubr.f32.mxu0 0.0
  %v1914 = vand.u32 %v1471, 4294901760
  %1915 = vmatmul.mubr.f32.gmra.mrb[0].mxu0 %v1914
  %v1916 = vpop.f32.mrb[0].mxu0
  %v1917 = vadd.f32 %v1828, %v1916
  %v1918 = vpop.f32.mrb[0].mxu0
  %1919 = vdwg.mxu0
  %1920 = vmatprep.subr.mxu0 0.0
  %v1921 = vand.u32 %v1455, 4294901760
  %1922 = vmatpush1.msra.mxu0 %v1921
  %1923 = vmatprep.subr.mxu0 0.0
  %v1924 = vand.u32 %v1456, 4294901760
  %1925 = vmatpush1.msra.mxu0 %v1924
  %1926 = vmatprep.subr.mxu0 0.0
  %v1927 = vand.u32 %v1457, 4294901760
  %1928 = vmatpush1.msra.mxu0 %v1927
  %1929 = vmatprep.subr.mxu0 0.0
  %v1930 = vand.u32 %v1458, 4294901760
  %1931 = vmatpush1.msra.mxu0 %v1930
  %1932 = vmatprep.subr.mxu0 0.0
  %1933 = vmatpush1.msra.mxu0 0.0
  %1934 = vmatprep.subr.mxu0 0.0
  %1935 = vmatpush1.msra.mxu0 0.0
  %1936 = vmatprep.subr.mxu0 0.0
  %1937 = vmatpush1.msra.mxu0 0.0
  %1938 = vmatprep.subr.mxu0 0.0
  %1939 = vmatpush1.msra.mxu0 0.0
  %1940 = vmatprep.subr.mxu0 0.0
  %1941 = vmatpush1.msra.mxu0 0.0
  %1942 = vmatprep.subr.mxu0 0.0
  %1943 = vmatpush1.msra.mxu0 0.0
  %1944 = vmatprep.subr.mxu0 0.0
  %1945 = vmatpush1.msra.mxu0 0.0
  %1946 = vmatprep.subr.mxu0 0.0
  %1947 = vmatpush1.msra.mxu0 0.0
  %1948 = vmatprep.subr.mxu0 0.0
  %1949 = vmatpush1.msra.mxu0 0.0
  %1950 = vmatprep.subr.mxu0 0.0
  %1951 = vmatpush1.msra.mxu0 0.0
  %1952 = vmatprep.subr.mxu0 0.0
  %1953 = vmatpush1.msra.mxu0 0.0
  %1954 = vmatprep.subr.mxu0 0.0
  %1955 = vmatpush1.msra.mxu0 0.0
  %1956 = vmatprep.subr.mxu0 0.0
  %1957 = vmatpush1.msra.mxu0 0.0
  %1958 = vmatprep.subr.mxu0 0.0
  %1959 = vmatpush1.msra.mxu0 0.0
  %1960 = vmatprep.subr.mxu0 0.0
  %1961 = vmatpush1.msra.mxu0 0.0
  %1962 = vmatprep.subr.mxu0 0.0
  %1963 = vmatpush1.msra.mxu0 0.0
  %1964 = vmatprep.subr.mxu0 0.0
  %1965 = vmatpush1.msra.mxu0 0.0
  %1966 = vmatprep.subr.mxu0 0.0
  %1967 = vmatpush1.msra.mxu0 0.0
  %1968 = vmatprep.subr.mxu0 0.0
  %1969 = vmatpush1.msra.mxu0 0.0
  %1970 = vmatprep.subr.mxu0 0.0
  %1971 = vmatpush1.msra.mxu0 0.0
  %1972 = vmatprep.subr.mxu0 0.0
  %1973 = vmatpush1.msra.mxu0 0.0
  %1974 = vmatprep.subr.mxu0 0.0
  %1975 = vmatpush1.msra.mxu0 0.0
  %1976 = vmatprep.subr.mxu0 0.0
  %1977 = vmatpush1.msra.mxu0 0.0
  %1978 = vmatprep.subr.mxu0 0.0
  %1979 = vmatpush1.msra.mxu0 0.0
  %1980 = vmatprep.subr.mxu0 0.0
  %1981 = vmatpush1.msra.mxu0 0.0
  %1982 = vmatprep.subr.mxu0 0.0
  %1983 = vmatpush1.msra.mxu0 0.0
  %1984 = vmatprep.subr.mxu0 0.0
  %1985 = vmatpush1.msra.mxu0 0.0
  %1986 = vmatprep.subr.mxu0 0.0
  %1987 = vmatpush1.msra.mxu0 0.0
  %1988 = vmatprep.mubr.f32.mxu0 0.0
  %v1989 = vand.u32 %v1468, 4294901760
  %1990 = vmatmul.mubr.f32.gmra.mrb[0].mxu0 %v1989
  %v1991 = vpop.f32.mrb[0].mxu0
  %v1992 = vadd.f32 %v1911, %v1991
  %v1993 = vpop.f32.mrb[0].mxu0
  %1994 = vmatprep.mubr.f32.mxu0 0.0
  %v1995 = vand.u32 %v1471, 4294901760
  %1996 = vmatmul.mubr.f32.gmra.mrb[0].mxu0 %v1995
  %v1997 = vpop.f32.mrb[0].mxu0
  %v1998 = vadd.f32 %v1917, %v1997
  %v1999 = vpop.f32.mrb[0].mxu0
  %2000 = vdwg.mxu0
  %2003 = vrot.lane.b32.xlu0 %v1992, 127
  %v2004 = vpop.permute.xlu0 %2003
  %2005 = vrot.lane.b32.xlu0 %v1998, 127
  %v2006 = vpop.permute.xlu0 %2005
  %v2009 = vmax.f32 %v1992, %v2004
  %v2010 = vmax.f32 %v1998, %v2006
  %v2011 = vsub.f32 %v1992, %v2009
  %v2012 = vsub.f32 %v1998, %v2010
  %v2013 = vmul.f32 %v2011, 1.442695
  %v2014 = vpow.pop %v2013
  %v2015 = vmul.f32 %v2012, 1.442695
  %v2016 = vpow.pop %v2015
  %2019 = vrot.lane.b32.xlu0 %v2009, 1
  %v2020 = vpop.permute.xlu0 %2019
  %2021 = vrot.lane.b32.xlu0 %v2010, 1
  %v2022 = vpop.permute.xlu0 %2021
  %v2025 = vsub.f32 %v1992, %v2020
  %v2026 = vsub.f32 %v1998, %v2022
  %v2027 = vmul.f32 %v2025, 1.442695
  %v2028 = vpow.pop %v2027
  %v2029 = vmul.f32 %v2026, 1.442695
  %v2030 = vpow.pop %v2029
  %2033 = vrot.lane.b32.xlu0 %v2028, 127
  %v2034 = vpop.permute.xlu0 %2033
  %2035 = vrot.lane.b32.xlu0 %v2030, 127
  %v2036 = vpop.permute.xlu0 %2035
  %v2039 = vadd.f32 %v2014, %v2034
  %v2040 = vadd.f32 %v2016, %v2036
  %v2041 = vrcp.pop %v2039
  %v2042 = vmul.f32 %v2014, %v2041
  %v2043 = vrcp.pop %v2040
  %v2044 = vmul.f32 %v2016, %v2043
  %2047 = vrot.lane.b32.xlu0 %v2039, 1
  %v2048 = vpop.permute.xlu0 %2047
  %2049 = vrot.lane.b32.xlu0 %v2040, 1
  %v2050 = vpop.permute.xlu0 %2049
  %v2053 = vrcp.pop %v2048
  %v2054 = vmul.f32 %v2028, %v2053
  %v2055 = vrcp.pop %v2050
  %v2056 = vmul.f32 %v2030, %v2055
  %v2057 = vld [vmem:[%s3] sm:$0xff]
  %v2058 = vld [vmem:[%s3 + $0x8] sm:$0xff]
  %vm2059 = vcmp.gt.f32.partialorder %v2057, 0.5
  %vm2060 = vcmp.gt.f32.partialorder %v2058, 0.5
  %v2061 = vsel %vm2059, 1.0, %v2042
  %v2062 = vsel %vm2060, 1.0, %v2044
  %2065 = vrot.lane.b32.xlu0 %v2054, 127
  %v2066 = vpop.permute.xlu0 %2065
  %2067 = vrot.lane.b32.xlu0 %v2056, 127
  %v2068 = vpop.permute.xlu0 %2067
  %v2071 = vsel %vm2059, 1.0, %v2066
  %v2072 = vsel %vm2060, 1.0, %v2068
  %v2073 = vmax.f32 %v2061, %v2071
  %v2074 = vmax.f32 %v2062, %v2072
  %vm2075 = vcmp.gt.f32.partialorder %v2071, %v2061
  %vm2076 = vcmp.gt.f32.partialorder %v2072, %v2062
  %v2077 = vsel %vm2075, 1, 0
  %v2078 = vsel %vm2076, 1, 0
  %v2079 = vcvt.s32.f32 %v2077
  %v2080 = vcvt.s32.f32 %v2078
  %v2081 = vadd.f32 %v2073, 1e-20
  %v2082 = vadd.f32 %v2074, 1e-20
  %v2083 = vlog2.pop %v2081
  %v2084 = vmul.f32 %v2083, 0.6931472
  %v2085 = vlog2.pop %v2082
  %v2086 = vmul.f32 %v2085, 0.6931472
  %2089 = vrot.lane.b32.xlu0 %v2079, 1
  %v2090 = vpop.permute.xlu0 %2089
  %2091 = vrot.lane.b32.xlu0 %v2080, 1
  %v2092 = vpop.permute.xlu0 %2091
  %2097 = vrot.lane.b32.xlu0 %v2084, 2
  %v2098 = vpop.permute.xlu0 %2097
  %2099 = vrot.lane.b32.xlu0 %v2086, 2
  %v2100 = vpop.permute.xlu0 %2099
  %vm2103 = vcmask 7168
  %v2104 = vsel %vm2103, %v2073, %v2090
  %v2105 = vsel %vm2103, %v2074, %v2092
  %vm2106 = vcmask 15360
  %v2107 = vsel %vm2106, %v2104, %v2098
  %v2108 = vsel %vm2106, %v2105, %v2100
  %vm2109 = vcmask 23552
  %2110 = vst.msk [vmem:[%s9] sm:$0xff] %vm2109, %v2107
  %2111 = vst.msk [vmem:[%s9 + $0x8] sm:$0xff] %vm2109, %v2108
  // Predicated region
  $region34: #{extract_forward.1} parent=0 // pred_check
    _
  $region35: #{extract_forward.1} parent=0 // pred_check_branch
    %2113 = sbr.rel (0) target = $region37
  $region36: #{extract_forward.1} parent=0 // pred_region
    _
  $region37: #{extract_forward.1} parent=0 // pred_fallthru
    _
  // Predicated region
  $region38: #{extract_forward.1} parent=0 // pred_check
    _
  $region39: #{extract_forward.1} parent=0 // pred_check_branch
    %2115 = sbr.rel (0) target = $region41
  $region40: #{extract_forward.1} parent=0 // pred_region
    _
  $region41: #{extract_forward.1} parent=0 // pred_fallthru
    _
  // Predicated region
  $region42: #{extract_forward.1} parent=0 // pred_check
    _
  $region43: #{extract_forward.1} parent=0 // pred_check_branch
    %2117 = sbr.rel (0) target = $region45
  $region44: #{extract_forward.1} parent=0 // pred_region
    _
  $region45: #{extract_forward.1} parent=0 // pred_fallthru
    _
  // Predicated region
  $region46: #{extract_forward.1} parent=0 // pred_check
    _
  $region47: #{extract_forward.1} parent=0 // pred_check_branch
    %2119 = sbr.rel (0) target = $region49
  $region48: #{extract_forward.1} parent=0 // pred_region
    _
  $region49: #{extract_forward.1} parent=0 // pred_fallthru
    _

</llo_original>
